<compile_context>
chip_gen: v5e
topology: v5e:2x2
jax: 0.10.0
libtpu: 0.0.40
codegen_flags: <defaults>
</compile_context>

<pallas_src>
import functools

import jax
import jax.numpy as jnp
from jax.experimental import pallas as pl
from jax.experimental.pallas import tpu as pltpu


# --------------------------------- kernel -----------------------------------

def mhsa_kernel(att_bias,
                q_ref, k_ref, v_ref,
                wq_ref, bq_ref, wk_ref, bk_ref, wv_ref, bv_ref,
                wo_ref, bo_ref,
                out_ref, acc_ref):
    h = pl.program_id(1)
    TB, S, D = q_ref.shape
    T = TB * S

    # Fold (TB, S, D) -> (TB*S, D): layout-free reshape, gives 128-row matmuls.
    xq = q_ref[...].reshape(T, D).astype(jnp.bfloat16)
    xk = k_ref[...].reshape(T, D).astype(jnp.bfloat16)
    xv = v_ref[...].reshape(T, D).astype(jnp.bfloat16)

    # Per-head projections (head = grid axis 1, weights pre-split per head).
    # The attention scale is already folded into wq/bq.
    qh = jnp.dot(xq, wq_ref[0], preferred_element_type=jnp.float32) + bq_ref[0]
    kh = jnp.dot(xk, wk_ref[0], preferred_element_type=jnp.float32) + bk_ref[0]
    vh = jnp.dot(xv, wv_ref[0], preferred_element_type=jnp.float32) + bv_ref[0]

    A = qh.shape[-1]
    O = vh.shape[-1]
    qh = qh.reshape(TB, S, A).astype(jnp.bfloat16)
    kh = kh.reshape(TB, S, A).astype(jnp.bfloat16)
    vh = vh.reshape(TB, S, O).astype(jnp.bfloat16)

    # Sigmoid-biased attention, batched over the TB batch elements.
    s = jnp.einsum('bqa,bka->bqk', qh, kh,
                   preferred_element_type=jnp.float32)            # (TB, S, S) f32
    s = jax.nn.sigmoid(s) - att_bias
    # Explicit softmax: exp / sum, normalisation via approximate EUP reciprocal.
    p = jnp.exp(s - jnp.max(s, axis=-1, keepdims=True))
    p = p * pl.reciprocal(jnp.sum(p, axis=-1, keepdims=True), approx=True)
    # TODO(synk): att_dropout on the scores is identity at inference.
    o = jnp.einsum('bqk,bko->bqo', p.astype(jnp.bfloat16), vh,
                   preferred_element_type=jnp.float32)            # (TB, S, O)

    # Partial output projection for this head; accumulate over the head axis
    # (no lane-axis concatenation of heads).
    part = jnp.dot(o.reshape(T, O).astype(jnp.bfloat16), wo_ref[0],
                   preferred_element_type=jnp.float32)            # (T, D_out)

    @pl.when(h == 0)
    def _():
        acc_ref[...] = jnp.zeros_like(acc_ref)

    acc_ref[...] += part

    @pl.when(h == pl.num_programs(1) - 1)
    def _():
        out_ref[...] = (acc_ref[...] + bo_ref[...]).reshape(out_ref.shape)


# --------------------------------- wrapper ----------------------------------

def mhsa_forward(q_in, k_in, v_in, packed, *, att_bias, block_b=None):
    B, S, D = q_in.shape
    H, _, A = packed['wq'].shape
    O = packed['wv'].shape[-1]
    D_out = packed['wo'].shape[-1]

    if block_b is None:
        block_b = max(1, min(B, 128 // S))      # aim for >=128 folded rows
        while B % block_b:
            block_b -= 1
    TB = block_b
    grid = (B // TB, H)

    x_spec = pl.BlockSpec((TB, S, D), lambda b, h: (b, 0, 0))
    in_specs = [
        x_spec, x_spec, x_spec,
        pl.BlockSpec((1, D, A), lambda b, h: (h, 0, 0)),      # wq (per head)
        pl.BlockSpec((1, 1, A), lambda b, h: (h, 0, 0)),      # bq
        pl.BlockSpec((1, D, A), lambda b, h: (h, 0, 0)),      # wk
        pl.BlockSpec((1, 1, A), lambda b, h: (h, 0, 0)),      # bk
        pl.BlockSpec((1, D, O), lambda b, h: (h, 0, 0)),      # wv
        pl.BlockSpec((1, 1, O), lambda b, h: (h, 0, 0)),      # bv
        pl.BlockSpec((1, O, D_out), lambda b, h: (h, 0, 0)),  # wo (per-head rows)
        pl.BlockSpec((1, D_out), lambda b, h: (0, 0)),        # bo
    ]
    out_spec = pl.BlockSpec((TB, S, D_out), lambda b, h: (b, 0, 0))

    return pl.pallas_call(
        functools.partial(mhsa_kernel, att_bias),
        out_shape=jax.ShapeDtypeStruct((B, S, D_out), jnp.float32),
        grid=grid,
        in_specs=in_specs,
        out_specs=out_spec,
        scratch_shapes=[pltpu.VMEM((TB * S, D_out), jnp.float32)],
        compiler_params=pltpu.CompilerParams(
            dimension_semantics=("parallel", "arbitrary")),
    )(q_in, k_in, v_in,
      packed['wq'], packed['bq'], packed['wk'], packed['bk'],
      packed['wv'], packed['bv'], packed['wo'], packed['bo'])


# ------------------------------ parameters -----------------------------------

def init_mhsa_params(key, in_dim, att_dim, out_dim, num_heads):
    """Canonical f32 parameters (y = x @ w + b), matching torch.nn.Linear init."""
    def linear(k, din, dout):
        kw, kb = jax.random.split(k)
        bound = 1.0 / (din ** 0.5)
        w = jax.random.uniform(kw, (din, dout), jnp.float32, -bound, bound)
        b = jax.random.uniform(kb, (dout,), jnp.float32, -bound, bound)
        return w, b
    k1, k2, k3, k4 = jax.random.split(key, 4)
    wq, bq = linear(k1, in_dim, num_heads * att_dim)
    wk, bk = linear(k2, in_dim, num_heads * att_dim)
    wv, bv = linear(k3, in_dim, num_heads * out_dim)
    wo, bo = linear(k4, num_heads * out_dim, out_dim)
    return dict(wq=wq, bq=bq, wk=wk, bk=bk, wv=wv, bv=bv, wo=wo, bo=bo)


def pack_mhsa_params(p, *, num_heads, att_dim, out_dim):
    """One-time host-side repack: per-head split, scale folded into Q, bf16 weights."""
    H, A, O = num_heads, att_dim, out_dim
    D = p['wq'].shape[0]
    scale = A ** -0.5

    def split_heads(w, b, hd):     # (D, H*hd) -> (H, D, hd); (H*hd,) -> (H, 1, hd)
        return (jnp.transpose(w.reshape(D, H, hd), (1, 0, 2)),
                b.reshape(H, 1, hd))

    wq, bq = split_heads(p['wq'] * scale, p['bq'] * scale, A)
    wk, bk = split_heads(p['wk'], p['bk'], A)
    wv, bv = split_heads(p['wv'], p['bv'], O)
    wo = p['wo'].reshape(H, O, -1)            # (H*O, D_out) -> (H, O, D_out)
    bo = p['bo'].reshape(1, -1)
    bf16 = jnp.bfloat16
    return dict(wq=wq.astype(bf16), bq=bq, wk=wk.astype(bf16), bk=bk,
                wv=wv.astype(bf16), bv=bv, wo=wo.astype(bf16), bo=bo)


# ---------------------------- pure-JAX reference ------------------------------

def mhsa_reference(q_in, k_in, v_in, p, *, num_heads, att_dim, out_dim, att_bias):
    B, S, D = q_in.shape
    H, A, O = num_heads, att_dim, out_dim
    q = (q_in.reshape(B * S, D) @ p['wq'] + p['bq']).reshape(B, S, H, A)
    k = (k_in.reshape(B * S, D) @ p['wk'] + p['bk']).reshape(B, S, H, A)
    v = (v_in.reshape(B * S, D) @ p['wv'] + p['bv']).reshape(B, S, H, O)
    q = jnp.transpose(q, (0, 2, 1, 3)) * (A ** -0.5)
    k = jnp.transpose(k, (0, 2, 1, 3))
    v = jnp.transpose(v, (0, 2, 1, 3))
    s = jnp.einsum('bhqa,bhka->bhqk', q, k)
    s = jax.nn.softmax(jax.nn.sigmoid(s) - att_bias, axis=-1)
    o = jnp.einsum('bhqk,bhko->bhqo', s, v)
    o = jnp.transpose(o, (0, 2, 1, 3)).reshape(B, S, H * O)
    return o @ p['wo'] + p['bo']


# ----------------------------------- main -------------------------------------

if __name__ == "__main__":
    B, S = 32, 8            # 32 batch elems -> grid (2, H): 128-row folded matmuls,
    in_dim = 32             # and 2 parallel batch steps (keeps both v7x TCs busy).
    att_dim = 8
    num_heads = 4
    out_dim = 32
    att_bias = 0.5

    key = jax.random.PRNGKey(0)
    kq, kk, kv, kp = jax.random.split(key, 4)
    q_in = jax.random.normal(kq, (B, S, in_dim), jnp.float32)
    k_in = jax.random.normal(kk, (B, S, in_dim), jnp.float32)
    v_in = jax.random.normal(kv, (B, S, in_dim), jnp.float32)

    params = init_mhsa_params(kp, in_dim, att_dim, out_dim, num_heads)
    packed = pack_mhsa_params(params, num_heads=num_heads,
                              att_dim=att_dim, out_dim=out_dim)

    out = mhsa_forward(q_in, k_in, v_in, packed, att_bias=att_bias)
    out = jax.block_until_ready(out)
    assert out.shape == (B, S, out_dim)

    ref = mhsa_reference(q_in, k_in, v_in, params, num_heads=num_heads,
                         att_dim=att_dim, out_dim=out_dim, att_bias=att_bias)
    max_err = float(jnp.max(jnp.abs(out - ref)))
    assert max_err < 5e-2, f"max abs error {max_err}"
    print("KERNEL_OK")
</pallas_src>

<mosaic_0001>
module attributes {stable_mosaic.version = 11 : i64} {
  func.func @mhsa_kernel(%arg0: i32, %arg1: i32, %arg2: memref<16x8x32xf32, #tpu.memory_space<vmem>>, %arg3: memref<16x8x32xf32, #tpu.memory_space<vmem>>, %arg4: memref<16x8x32xf32, #tpu.memory_space<vmem>>, %arg5: memref<1x32x8xbf16, #tpu.memory_space<vmem>>, %arg6: memref<1x1x8xf32, #tpu.memory_space<vmem>>, %arg7: memref<1x32x8xbf16, #tpu.memory_space<vmem>>, %arg8: memref<1x1x8xf32, #tpu.memory_space<vmem>>, %arg9: memref<1x32x32xbf16, #tpu.memory_space<vmem>>, %arg10: memref<1x1x32xf32, #tpu.memory_space<vmem>>, %arg11: memref<1x32x32xbf16, #tpu.memory_space<vmem>>, %arg12: memref<1x32xf32, #tpu.memory_space<vmem>>, %arg13: memref<16x8x32xf32, #tpu.memory_space<vmem>>, %arg14: memref<128x32xf32, #tpu.memory_space<vmem>>) attributes {dimension_semantics = [#tpu.dimension_semantics<parallel>, #tpu.dimension_semantics<arbitrary>], iteration_bounds = array<i64: 2, 4>, scalar_prefetch = 0 : i64, scratch_operands = 1 : i64, tpu.core_type = #tpu.core_type<tc>, window_params = [{transform_indices = @transform_0, window_bounds = array<i64: 16, 8, 32>}, {transform_indices = @transform_1, window_bounds = array<i64: 16, 8, 32>}, {transform_indices = @transform_2, window_bounds = array<i64: 16, 8, 32>}, {transform_indices = @transform_3, window_bounds = array<i64: 1, 32, 8>}, {transform_indices = @transform_4, window_bounds = array<i64: 1, 1, 8>}, {transform_indices = @transform_5, window_bounds = array<i64: 1, 32, 8>}, {transform_indices = @transform_6, window_bounds = array<i64: 1, 1, 8>}, {transform_indices = @transform_7, window_bounds = array<i64: 1, 32, 32>}, {transform_indices = @transform_8, window_bounds = array<i64: 1, 1, 32>}, {transform_indices = @transform_9, window_bounds = array<i64: 1, 32, 32>}, {pipeline_mode = #tpu.pipeline_mode<synchronous>, transform_indices = @transform_10, window_bounds = array<i64: 1, 32>}, {transform_indices = @transform_11, window_bounds = array<i64: 16, 8, 32>}]} {
    %c0 = arith.constant 0 : index
    %c0_0 = arith.constant 0 : index
    %c0_1 = arith.constant 0 : index
    %0 = vector.load %arg2[%c0, %c0_0, %c0_1] : memref<16x8x32xf32, #tpu.memory_space<vmem>>, vector<16x8x32xf32>
    %1 = vector.shape_cast %0 : vector<16x8x32xf32> to vector<128x32xf32>
    %2 = arith.truncf %1 : vector<128x32xf32> to vector<128x32xbf16>
    %c0_2 = arith.constant 0 : index
    %c0_3 = arith.constant 0 : index
    %c0_4 = arith.constant 0 : index
    %3 = vector.load %arg3[%c0_2, %c0_3, %c0_4] : memref<16x8x32xf32, #tpu.memory_space<vmem>>, vector<16x8x32xf32>
    %4 = vector.shape_cast %3 : vector<16x8x32xf32> to vector<128x32xf32>
    %5 = arith.truncf %4 : vector<128x32xf32> to vector<128x32xbf16>
    %c0_5 = arith.constant 0 : index
    %c0_6 = arith.constant 0 : index
    %c0_7 = arith.constant 0 : index
    %6 = vector.load %arg4[%c0_5, %c0_6, %c0_7] : memref<16x8x32xf32, #tpu.memory_space<vmem>>, vector<16x8x32xf32>
    %7 = vector.shape_cast %6 : vector<16x8x32xf32> to vector<128x32xf32>
    %8 = arith.truncf %7 : vector<128x32xf32> to vector<128x32xbf16>
    %c0_8 = arith.constant 0 : index
    %c0_9 = arith.constant 0 : index
    %c0_10 = arith.constant 0 : index
    %9 = vector.load %arg5[%c0_8, %c0_9, %c0_10] : memref<1x32x8xbf16, #tpu.memory_space<vmem>>, vector<1x32x8xbf16>
    %10 = vector.shape_cast %9 : vector<1x32x8xbf16> to vector<32x8xbf16>
    %cst = arith.constant dense<0.000000e+00> : vector<128x8xf32>
    %11 = tpu.matmul %2, %10, %cst {dimension_numbers = #tpu.dot_dimension_numbers<[1], [0], [0], [1], [0, 0, 1, 1], [], []>} : vector<128x32xbf16>, vector<32x8xbf16>, vector<128x8xf32> -> vector<128x8xf32>
    %c0_11 = arith.constant 0 : index
    %c0_12 = arith.constant 0 : index
    %c0_13 = arith.constant 0 : index
    %12 = vector.load %arg6[%c0_11, %c0_12, %c0_13] : memref<1x1x8xf32, #tpu.memory_space<vmem>>, vector<1x1x8xf32>
    %13 = vector.shape_cast %12 : vector<1x1x8xf32> to vector<1x8xf32>
    %14 = vector.broadcast %13 : vector<1x8xf32> to vector<128x8xf32>
    %15 = arith.addf %11, %14 : vector<128x8xf32>
    %c0_14 = arith.constant 0 : index
    %c0_15 = arith.constant 0 : index
    %c0_16 = arith.constant 0 : index
    %16 = vector.load %arg7[%c0_14, %c0_15, %c0_16] : memref<1x32x8xbf16, #tpu.memory_space<vmem>>, vector<1x32x8xbf16>
    %17 = vector.shape_cast %16 : vector<1x32x8xbf16> to vector<32x8xbf16>
    %cst_17 = arith.constant dense<0.000000e+00> : vector<128x8xf32>
    %18 = tpu.matmul %5, %17, %cst_17 {dimension_numbers = #tpu.dot_dimension_numbers<[1], [0], [0], [1], [0, 0, 1, 1], [], []>} : vector<128x32xbf16>, vector<32x8xbf16>, vector<128x8xf32> -> vector<128x8xf32>
    %c0_18 = arith.constant 0 : index
    %c0_19 = arith.constant 0 : index
    %c0_20 = arith.constant 0 : index
    %19 = vector.load %arg8[%c0_18, %c0_19, %c0_20] : memref<1x1x8xf32, #tpu.memory_space<vmem>>, vector<1x1x8xf32>
    %20 = vector.shape_cast %19 : vector<1x1x8xf32> to vector<1x8xf32>
    %21 = vector.broadcast %20 : vector<1x8xf32> to vector<128x8xf32>
    %22 = arith.addf %18, %21 : vector<128x8xf32>
    %c0_21 = arith.constant 0 : index
    %c0_22 = arith.constant 0 : index
    %c0_23 = arith.constant 0 : index
    %23 = vector.load %arg9[%c0_21, %c0_22, %c0_23] : memref<1x32x32xbf16, #tpu.memory_space<vmem>>, vector<1x32x32xbf16>
    %24 = vector.shape_cast %23 : vector<1x32x32xbf16> to vector<32x32xbf16>
    %cst_24 = arith.constant dense<0.000000e+00> : vector<128x32xf32>
    %25 = tpu.matmul %8, %24, %cst_24 {dimension_numbers = #tpu.dot_dimension_numbers<[1], [0], [0], [1], [0, 0, 1, 1], [], []>} : vector<128x32xbf16>, vector<32x32xbf16>, vector<128x32xf32> -> vector<128x32xf32>
    %c0_25 = arith.constant 0 : index
    %c0_26 = arith.constant 0 : index
    %c0_27 = arith.constant 0 : index
    %26 = vector.load %arg10[%c0_25, %c0_26, %c0_27] : memref<1x1x32xf32, #tpu.memory_space<vmem>>, vector<1x1x32xf32>
    %27 = vector.shape_cast %26 : vector<1x1x32xf32> to vector<1x32xf32>
    %28 = vector.broadcast %27 : vector<1x32xf32> to vector<128x32xf32>
    %29 = arith.addf %25, %28 : vector<128x32xf32>
    %30 = vector.shape_cast %15 : vector<128x8xf32> to vector<16x8x8xf32>
    %31 = arith.truncf %30 : vector<16x8x8xf32> to vector<16x8x8xbf16>
    %32 = vector.shape_cast %22 : vector<128x8xf32> to vector<16x8x8xf32>
    %33 = arith.truncf %32 : vector<16x8x8xf32> to vector<16x8x8xbf16>
    %34 = vector.shape_cast %29 : vector<128x32xf32> to vector<16x8x32xf32>
    %35 = arith.truncf %34 : vector<16x8x32xf32> to vector<16x8x32xbf16>
    "tpu.trace_start"() <{level = 10 : i32, message = "bqa,bka->bqk"}> : () -> ()
    %cst_28 = arith.constant dense<0.000000e+00> : vector<16x8x8xf32>
    %36 = tpu.matmul %31, %33, %cst_28 {dimension_numbers = #tpu.dot_dimension_numbers<[2], [2], [1], [1], [0, 0, 0, 1, 1, 1], [0], [0]>} : vector<16x8x8xbf16>, vector<16x8x8xbf16>, vector<16x8x8xf32> -> vector<16x8x8xf32>
    "tpu.trace_stop"() : () -> ()
    %37 = arith.negf %36 : vector<16x8x8xf32>
    %38 = math.exp %37 : vector<16x8x8xf32>
    %cst_29 = arith.constant 1.000000e+00 : f32
    %39 = vector.broadcast %cst_29 : f32 to vector<16x8x8xf32>
    %40 = arith.addf %39, %38 : vector<16x8x8xf32>
    %41 = arith.divf %39, %40 : vector<16x8x8xf32>
    %cst_30 = arith.constant 5.000000e-01 : f32
    %42 = vector.broadcast %cst_30 : f32 to vector<16x8x8xf32>
    %43 = arith.subf %41, %42 : vector<16x8x8xf32>
    %cst_31 = arith.constant dense<0xFF800000> : vector<16x8xf32>
    %44 = vector.multi_reduction <maximumf>, %43, %cst_31 [2] : vector<16x8x8xf32> to vector<16x8xf32>
    %45 = vector.shape_cast %44 : vector<16x8xf32> to vector<16x8x1xf32>
    %46 = vector.broadcast %45 : vector<16x8x1xf32> to vector<16x8x8xf32>
    %47 = arith.subf %43, %46 : vector<16x8x8xf32>
    %48 = math.exp %47 : vector<16x8x8xf32>
    %cst_32 = arith.constant dense<0.000000e+00> : vector<16x8xf32>
    %49 = vector.multi_reduction <add>, %48, %cst_32 [2] : vector<16x8x8xf32> to vector<16x8xf32>
    %50 = vector.shape_cast %49 : vector<16x8xf32> to vector<16x8x1xf32>
    %51 = tpu.reciprocal %50 {approx = true} : vector<16x8x1xf32> -> vector<16x8x1xf32>
    %52 = vector.broadcast %51 : vector<16x8x1xf32> to vector<16x8x8xf32>
    %53 = arith.mulf %48, %52 : vector<16x8x8xf32>
    %54 = arith.truncf %53 : vector<16x8x8xf32> to vector<16x8x8xbf16>
    "tpu.trace_start"() <{level = 10 : i32, message = "bqk,bko->bqo"}> : () -> ()
    %cst_33 = arith.constant dense<0.000000e+00> : vector<16x8x32xf32>
    %55 = tpu.matmul %54, %35, %cst_33 {dimension_numbers = #tpu.dot_dimension_numbers<[2], [1], [1], [2], [0, 0, 0, 1, 1, 2], [0], [0]>} : vector<16x8x8xbf16>, vector<16x8x32xbf16>, vector<16x8x32xf32> -> vector<16x8x32xf32>
    "tpu.trace_stop"() : () -> ()
    %56 = vector.shape_cast %55 : vector<16x8x32xf32> to vector<128x32xf32>
    %57 = arith.truncf %56 : vector<128x32xf32> to vector<128x32xbf16>
    %c0_34 = arith.constant 0 : index
    %c0_35 = arith.constant 0 : index
    %c0_36 = arith.constant 0 : index
    %58 = vector.load %arg11[%c0_34, %c0_35, %c0_36] : memref<1x32x32xbf16, #tpu.memory_space<vmem>>, vector<1x32x32xbf16>
    %59 = vector.shape_cast %58 : vector<1x32x32xbf16> to vector<32x32xbf16>
    %cst_37 = arith.constant dense<0.000000e+00> : vector<128x32xf32>
    %60 = tpu.matmul %57, %59, %cst_37 {dimension_numbers = #tpu.dot_dimension_numbers<[1], [0], [0], [1], [0, 0, 1, 1], [], []>} : vector<128x32xbf16>, vector<32x32xbf16>, vector<128x32xf32> -> vector<128x32xf32>
    %c0_i32 = arith.constant 0 : i32
    %61 = arith.cmpi eq, %arg1, %c0_i32 : i32
    %62 = arith.extui %61 : i1 to i32
    %c0_i32_38 = arith.constant 0 : i32
    %63 = arith.cmpi ne, %62, %c0_i32_38 : i32
    scf.if %63 {
      %cst_44 = arith.constant 0.000000e+00 : f32
      %70 = vector.broadcast %cst_44 : f32 to vector<128x32xf32>
      %c0_45 = arith.constant 0 : index
      %c0_46 = arith.constant 0 : index
      %71 = vector.load %arg14[%c0_45, %c0_46] : memref<128x32xf32, #tpu.memory_space<vmem>>, vector<128x32xf32>
      tpu.vector_store %arg14[%c0_45, %c0_46], %70 {strides = array<i32>} : memref<128x32xf32, #tpu.memory_space<vmem>>, vector<128x32xf32>,
    } else {
    }
    %c0_39 = arith.constant 0 : index
    %c0_40 = arith.constant 0 : index
    %64 = vector.load %arg14[%c0_39, %c0_40] : memref<128x32xf32, #tpu.memory_space<vmem>>, vector<128x32xf32>
    %65 = arith.addf %64, %60 : vector<128x32xf32>
    %c0_41 = arith.constant 0 : index
    %c0_42 = arith.constant 0 : index
    %66 = vector.load %arg14[%c0_41, %c0_42] : memref<128x32xf32, #tpu.memory_space<vmem>>, vector<128x32xf32>
    tpu.vector_store %arg14[%c0_41, %c0_42], %65 {strides = array<i32>} : memref<128x32xf32, #tpu.memory_space<vmem>>, vector<128x32xf32>,
    %c3_i32 = arith.constant 3 : i32
    %67 = arith.cmpi eq, %arg1, %c3_i32 : i32
    %68 = arith.extui %67 : i1 to i32
    %c0_i32_43 = arith.constant 0 : i32
    %69 = arith.cmpi ne, %68, %c0_i32_43 : i32
    scf.if %69 {
      %c0_44 = arith.constant 0 : index
      %c0_45 = arith.constant 0 : index
      %70 = vector.load %arg14[%c0_44, %c0_45] : memref<128x32xf32, #tpu.memory_space<vmem>>, vector<128x32xf32>
      %c0_46 = arith.constant 0 : index
      %c0_47 = arith.constant 0 : index
      %71 = vector.load %arg12[%c0_46, %c0_47] : memref<1x32xf32, #tpu.memory_space<vmem>>, vector<1x32xf32>
      %72 = vector.broadcast %71 : vector<1x32xf32> to vector<128x32xf32>
      %73 = arith.addf %70, %72 : vector<128x32xf32>
      %74 = vector.shape_cast %73 : vector<128x32xf32> to vector<16x8x32xf32>
      %c0_48 = arith.constant 0 : index
      %c0_49 = arith.constant 0 : index
      %c0_50 = arith.constant 0 : index
      %75 = vector.load %arg13[%c0_48, %c0_49, %c0_50] : memref<16x8x32xf32, #tpu.memory_space<vmem>>, vector<16x8x32xf32>
      tpu.vector_store %arg13[%c0_48, %c0_49, %c0_50], %74 {strides = array<i32>} : memref<16x8x32xf32, #tpu.memory_space<vmem>>, vector<16x8x32xf32>,
    } else {
    }
    return
  }
  func.func @transform_0(%arg0: i32, %arg1: i32) -> (i32, i32, i32) {
    %c0_i32 = arith.constant 0 : i32
    %c0_i32_0 = arith.constant 0 : i32
    %c0_i32_1 = arith.constant 0 : i32
    return %arg0, %c0_i32, %c0_i32_0 : i32, i32, i32
  }
  func.func @transform_1(%arg0: i32, %arg1: i32) -> (i32, i32, i32) {
    %c0_i32 = arith.constant 0 : i32
    %c0_i32_0 = arith.constant 0 : i32
    %c0_i32_1 = arith.constant 0 : i32
    return %arg0, %c0_i32, %c0_i32_0 : i32, i32, i32
  }
  func.func @transform_2(%arg0: i32, %arg1: i32) -> (i32, i32, i32) {
    %c0_i32 = arith.constant 0 : i32
    %c0_i32_0 = arith.constant 0 : i32
    %c0_i32_1 = arith.constant 0 : i32
    return %arg0, %c0_i32, %c0_i32_0 : i32, i32, i32
  }
  func.func @transform_3(%arg0: i32, %arg1: i32) -> (i32, i32, i32) {
    %c0_i32 = arith.constant 0 : i32
    %c0_i32_0 = arith.constant 0 : i32
    %c0_i32_1 = arith.constant 0 : i32
    return %arg1, %c0_i32, %c0_i32_0 : i32, i32, i32
  }
  func.func @transform_4(%arg0: i32, %arg1: i32) -> (i32, i32, i32) {
    %c0_i32 = arith.constant 0 : i32
    %c0_i32_0 = arith.constant 0 : i32
    %c0_i32_1 = arith.constant 0 : i32
    return %arg1, %c0_i32, %c0_i32_0 : i32, i32, i32
  }
  func.func @transform_5(%arg0: i32, %arg1: i32) -> (i32, i32, i32) {
    %c0_i32 = arith.constant 0 : i32
    %c0_i32_0 = arith.constant 0 : i32
    %c0_i32_1 = arith.constant 0 : i32
    return %arg1, %c0_i32, %c0_i32_0 : i32, i32, i32
  }
  func.func @transform_6(%arg0: i32, %arg1: i32) -> (i32, i32, i32) {
    %c0_i32 = arith.constant 0 : i32
    %c0_i32_0 = arith.constant 0 : i32
    %c0_i32_1 = arith.constant 0 : i32
    return %arg1, %c0_i32, %c0_i32_0 : i32, i32, i32
  }
  func.func @transform_7(%arg0: i32, %arg1: i32) -> (i32, i32, i32) {
    %c0_i32 = arith.constant 0 : i32
    %c0_i32_0 = arith.constant 0 : i32
    %c0_i32_1 = arith.constant 0 : i32
    return %arg1, %c0_i32, %c0_i32_0 : i32, i32, i32
  }
  func.func @transform_8(%arg0: i32, %arg1: i32) -> (i32, i32, i32) {
    %c0_i32 = arith.constant 0 : i32
    %c0_i32_0 = arith.constant 0 : i32
    %c0_i32_1 = arith.constant 0 : i32
    return %arg1, %c0_i32, %c0_i32_0 : i32, i32, i32
  }
  func.func @transform_9(%arg0: i32, %arg1: i32) -> (i32, i32, i32) {
    %c0_i32 = arith.constant 0 : i32
    %c0_i32_0 = arith.constant 0 : i32
    %c0_i32_1 = arith.constant 0 : i32
    return %arg1, %c0_i32, %c0_i32_0 : i32, i32, i32
  }
  func.func @transform_10(%arg0: i32, %arg1: i32) -> (i32, i32) {
    %c0_i32 = arith.constant 0 : i32
    %c0_i32_0 = arith.constant 0 : i32
    %c0_i32_1 = arith.constant 0 : i32
    return %c0_i32, %c0_i32_0 : i32, i32
  }
  func.func @transform_11(%arg0: i32, %arg1: i32) -> (i32, i32, i32) {
    %c0_i32 = arith.constant 0 : i32
    %c0_i32_0 = arith.constant 0 : i32
    %c0_i32_1 = arith.constant 0 : i32
    return %arg0, %c0_i32, %c0_i32_0 : i32, i32, i32
  }
}

</mosaic_0001>

<llo_original>
// kernel: tpu_custom_call.1
$region0: #{tpu_custom_call.1}
  #allocation0 [shape = 'u32[]', space=smem, size = 0x4, offset = 0x4, fixed_abs, tag = 'smem constant byte address 0x4 - core index']
  #allocation1 [shape = 'u32[72,128]{1,0:T(1,128)}', space=vmem, size = 0x9000, scoped, tag = 'internal scratch']
  #allocation2 [shape = 'f32[128,32]{1,0:T(8,128)}', space=vmem, size = 0x10000, scoped, tag = 'scratch operand']
  %s0 = inlined_call_operand.hbm [shape: f32[32,8,32], index: 0, kind: input, shape index: {}]
  %s1 = inlined_call_operand.hbm [shape: f32[32,8,32], index: 1, kind: input, shape index: {}]
  %s2 = inlined_call_operand.hbm [shape: f32[32,8,32], index: 2, kind: input, shape index: {}]
  %s3 = inlined_call_operand.vmem [shape: bf16[4,32,8], index: 3, kind: input, shape index: {}]
  %s4 = inlined_call_operand.vmem [shape: f32[4,1,8], index: 4, kind: input, shape index: {}]
  %s5 = inlined_call_operand.vmem [shape: bf16[4,32,8], index: 5, kind: input, shape index: {}]
  %s6 = inlined_call_operand.vmem [shape: f32[4,1,8], index: 6, kind: input, shape index: {}]
  %s7 = inlined_call_operand.vmem [shape: bf16[4,32,32], index: 7, kind: input, shape index: {}]
  %s8 = inlined_call_operand.vmem [shape: f32[4,1,32], index: 8, kind: input, shape index: {}]
  %s9 = inlined_call_operand.vmem [shape: bf16[4,32,32], index: 9, kind: input, shape index: {}]
  %s10 = inlined_call_operand.vmem [shape: f32[1,32], index: 10, kind: input, shape index: {}]
  %s11 = inlined_call_operand.hbm [shape: f32[32,8,32], index: 11, kind: output, shape index: {}]
  %s12 = sld [smem:[#allocation0]]
  $region97: #{tpu_custom_call.1} parent=0
    _
  %s14 = ssub.s32 1, %s12
  %s15 = scalar_select 0, %s14, %s12
  $region1: #{tpu_custom_call.1} parent=0
    #allocation3 [shape = 'u8[131072]{0}', space=vmem, size = 0x20000, scoped, tag = 'input window, operand 0']
    #allocation4 [shape = 's32[2]{0}', space=sflag, size = 0x8, scoped, tag = 'scoped memory for tpu_custom_call.1']
    #allocation5 [shape = 's32[2]{0}', space=sflag, size = 0x8, scoped, tag = 'scoped memory for tpu_custom_call.1']
    #allocation6 [shape = 'u8[131072]{0}', space=vmem, size = 0x20000, scoped, tag = 'input window, operand 1']
    #allocation7 [shape = 's32[2]{0}', space=sflag, size = 0x8, scoped, tag = 'scoped memory for tpu_custom_call.1']
    #allocation8 [shape = 'u8[131072]{0}', space=vmem, size = 0x20000, scoped, tag = 'input window, operand 2']
    #allocation9 [shape = 'u8[131072]{0}', space=vmem, size = 0x20000, scoped, tag = 'output window, operand 0']
    %16 = vsyncpa [#allocation4], 0
    %s17 = scalar_lea.sflag [#allocation4], 1
    %18 = vsyncpa %s17, 0
    %19 = vsyncpa [#allocation7], 0
    %s20 = scalar_lea.sflag [#allocation7], 1
    %21 = vsyncpa %s20, 0
    %22 = vsyncpa [#allocation5], 0
    %s23 = scalar_lea.sflag [#allocation5], 1
    %24 = vsyncpa %s23, 0
    loop: start=0, step=1, limit=10
    $region2: #{tpu_custom_call.1} parent=1 // loop_pre_header
      _
    $region3: #{tpu_custom_call.1} parent=1 // loop_header
      %s26 = sphi 0, %s30
      %p27 = scmp.ge.s32.totalorder %s26, 10
      %s33 = sphi 0, %s45
      %s34 = sphi 0, %s41
      %s35 = sphi 0, %s33
      %s36 = sphi 0, %s34
      %s37 = sphi 0, %s35
      %s38 = sphi 0, %s36
      %s48 = sphi 0, %s50
      %s51 = sphi 0, %s48
      %s52 = sphi 0, %s51
      %s68 = sphi 0, %s52
      %s74 = sphi 0, %s76
      %s77 = sphi 0, %s74
      %s78 = sphi 0, %s77
      %s94 = sphi 0, %s78
      %s100 = sphi 0, %s102
      %s103 = sphi 0, %s100
      %s104 = sphi 0, %s103
      %s120 = sphi 0, %s104
      %s126 = sphi 0, %s128
      %s129 = sphi 0, %s126
      %s130 = sphi 0, %s129
      %s146 = sphi 0, %s130
      %s152 = sphi 0, %s154
      %s155 = sphi 0, %s152
      %s156 = sphi 0, %s155
      %s172 = sphi 0, %s156
      %s178 = sphi 0, %s180
      %s181 = sphi 0, %s178
      %s182 = sphi 0, %s181
      %s198 = sphi 0, %s182
      %s204 = sphi 0, %s206
      %s207 = sphi 0, %s204
      %s208 = sphi 0, %s207
      %s224 = sphi 0, %s208
      %s230 = sphi 0, %s232
      %s233 = sphi 0, %s230
      %s234 = sphi 0, %s233
      %s250 = sphi 0, %s234
      %s256 = sphi 0, %s258
      %s259 = sphi 0, %s256
      %s260 = sphi 0, %s259
      %s276 = sphi 0, %s260
      %s282 = sphi 0, %s284
      %s285 = sphi 0, %s282
      %s286 = sphi 0, %s285
      %s302 = sphi 0, %s286
      %s306 = sphi 0, %s306
      %s308 = sphi 0, %s306
      %s309 = sphi 0, %s308
      %s323 = sphi 0, %s309
      %s329 = sphi 0, %s331
      %s332 = sphi 0, %s329
      %s333 = sphi 0, %s332
      %s349 = sphi 0, %s333
    $region4: #{tpu_custom_call.1} parent=1 // loop_header_branch
      %29 = sbr.rel (%p27) target = $region8
    $region5: #{tpu_custom_call.1} parent=1 // loop_body
      %s31 = ssub.s32 %s26, 1
      %s32 = ssub.s32 %s26, 2
      %s39 = sadd.s32 1, %s34
      %p40 = scmp.ge.s32.totalorder %s39, 4
      %s41 = scalar_select %p40, 0, %s39
      %s42 = sadd.s32 1, %s33
      %s43 = scalar_select %p40, %s42, %s33
      %p44 = scmp.ge.s32.totalorder %s43, 2
      %s45 = scalar_select %p44, 0, %s43
      %s46 = ssub.s32 %s33, %s45
      %p47 = scmp.eq.s32.totalorder %s46, 0
      %s49 = sadd.s32 %s48, 1
      %s50 = scalar_select %p47, %s48, %s49
      %p53 = pneg %p47
      %p54 = scmp.eq.s32.totalorder %s26, 7
      %p55 = por %p53, %p54
      %p56 = scmp.ne.s32.totalorder %s48, %s51
      %p57 = scmp.eq.s32.totalorder %s26, 0
      %p58 = por %p56, %p57
      %p59 = scmp.ne.s32.totalorder %s48, %s51
      %p60 = scmp.eq.s32.totalorder %s31, 7
      %p61 = por %p59, %p60
      %p62 = scmp.ne.s32.totalorder %s51, %s52
      %p63 = scmp.eq.s32.totalorder %s31, 0
      %p64 = por %p62, %p63
      %p65 = scmp.ne.s32.totalorder %s51, %s52
      %p66 = scmp.eq.s32.totalorder %s32, 7
      %p67 = por %p65, %p66
      %p69 = scmp.ne.s32.totalorder %s52, %s68
      %p70 = scmp.eq.s32.totalorder %s32, 0
      %p71 = por %p69, %p70
      %s72 = ssub.s32 %s33, %s45
      %p73 = scmp.eq.s32.totalorder %s72, 0
      %s75 = sadd.s32 %s74, 1
      %s76 = scalar_select %p73, %s74, %s75
      %p79 = pneg %p73
      %p80 = scmp.eq.s32.totalorder %s26, 7
      %p81 = por %p79, %p80
      %p82 = scmp.ne.s32.totalorder %s74, %s77
      %p83 = scmp.eq.s32.totalorder %s26, 0
      %p84 = por %p82, %p83
      %p85 = scmp.ne.s32.totalorder %s74, %s77
      %p86 = scmp.eq.s32.totalorder %s31, 7
      %p87 = por %p85, %p86
      %p88 = scmp.ne.s32.totalorder %s77, %s78
      %p89 = scmp.eq.s32.totalorder %s31, 0
      %p90 = por %p88, %p89
      %p91 = scmp.ne.s32.totalorder %s77, %s78
      %p92 = scmp.eq.s32.totalorder %s32, 7
      %p93 = por %p91, %p92
      %p95 = scmp.ne.s32.totalorder %s78, %s94
      %p96 = scmp.eq.s32.totalorder %s32, 0
      %p97 = por %p95, %p96
      %s98 = ssub.s32 %s33, %s45
      %p99 = scmp.eq.s32.totalorder %s98, 0
      %s101 = sadd.s32 %s100, 1
      %s102 = scalar_select %p99, %s100, %s101
      %p105 = pneg %p99
      %p106 = scmp.eq.s32.totalorder %s26, 7
      %p107 = por %p105, %p106
      %p108 = scmp.ne.s32.totalorder %s100, %s103
      %p109 = scmp.eq.s32.totalorder %s26, 0
      %p110 = por %p108, %p109
      %p111 = scmp.ne.s32.totalorder %s100, %s103
      %p112 = scmp.eq.s32.totalorder %s31, 7
      %p113 = por %p111, %p112
      %p114 = scmp.ne.s32.totalorder %s103, %s104
      %p115 = scmp.eq.s32.totalorder %s31, 0
      %p116 = por %p114, %p115
      %p117 = scmp.ne.s32.totalorder %s103, %s104
      %p118 = scmp.eq.s32.totalorder %s32, 7
      %p119 = por %p117, %p118
      %p121 = scmp.ne.s32.totalorder %s104, %s120
      %p122 = scmp.eq.s32.totalorder %s32, 0
      %p123 = por %p121, %p122
      %s124 = ssub.s32 %s34, %s41
      %p125 = scmp.eq.s32.totalorder %s124, 0
      %s127 = sadd.s32 %s126, 1
      %s128 = scalar_select %p125, %s126, %s127
      %p131 = pneg %p125
      %p132 = scmp.eq.s32.totalorder %s26, 7
      %p133 = por %p131, %p132
      %p134 = scmp.ne.s32.totalorder %s126, %s129
      %p135 = scmp.eq.s32.totalorder %s26, 0
      %p136 = por %p134, %p135
      %p137 = scmp.ne.s32.totalorder %s126, %s129
      %p138 = scmp.eq.s32.totalorder %s31, 7
      %p139 = por %p137, %p138
      %p140 = scmp.ne.s32.totalorder %s129, %s130
      %p141 = scmp.eq.s32.totalorder %s31, 0
      %p142 = por %p140, %p141
      %p143 = scmp.ne.s32.totalorder %s129, %s130
      %p144 = scmp.eq.s32.totalorder %s32, 7
      %p145 = por %p143, %p144
      %p147 = scmp.ne.s32.totalorder %s130, %s146
      %p148 = scmp.eq.s32.totalorder %s32, 0
      %p149 = por %p147, %p148
      %s150 = ssub.s32 %s34, %s41
      %p151 = scmp.eq.s32.totalorder %s150, 0
      %s153 = sadd.s32 %s152, 1
      %s154 = scalar_select %p151, %s152, %s153
      %p157 = pneg %p151
      %p158 = scmp.eq.s32.totalorder %s26, 7
      %p159 = por %p157, %p158
      %p160 = scmp.ne.s32.totalorder %s152, %s155
      %p161 = scmp.eq.s32.totalorder %s26, 0
      %p162 = por %p160, %p161
      %p163 = scmp.ne.s32.totalorder %s152, %s155
      %p164 = scmp.eq.s32.totalorder %s31, 7
      %p165 = por %p163, %p164
      %p166 = scmp.ne.s32.totalorder %s155, %s156
      %p167 = scmp.eq.s32.totalorder %s31, 0
      %p168 = por %p166, %p167
      %p169 = scmp.ne.s32.totalorder %s155, %s156
      %p170 = scmp.eq.s32.totalorder %s32, 7
      %p171 = por %p169, %p170
      %p173 = scmp.ne.s32.totalorder %s156, %s172
      %p174 = scmp.eq.s32.totalorder %s32, 0
      %p175 = por %p173, %p174
      %s176 = ssub.s32 %s34, %s41
      %p177 = scmp.eq.s32.totalorder %s176, 0
      %s179 = sadd.s32 %s178, 1
      %s180 = scalar_select %p177, %s178, %s179
      %p183 = pneg %p177
      %p184 = scmp.eq.s32.totalorder %s26, 7
      %p185 = por %p183, %p184
      %p186 = scmp.ne.s32.totalorder %s178, %s181
      %p187 = scmp.eq.s32.totalorder %s26, 0
      %p188 = por %p186, %p187
      %p189 = scmp.ne.s32.totalorder %s178, %s181
      %p190 = scmp.eq.s32.totalorder %s31, 7
      %p191 = por %p189, %p190
      %p192 = scmp.ne.s32.totalorder %s181, %s182
      %p193 = scmp.eq.s32.totalorder %s31, 0
      %p194 = por %p192, %p193
      %p195 = scmp.ne.s32.totalorder %s181, %s182
      %p196 = scmp.eq.s32.totalorder %s32, 7
      %p197 = por %p195, %p196
      %p199 = scmp.ne.s32.totalorder %s182, %s198
      %p200 = scmp.eq.s32.totalorder %s32, 0
      %p201 = por %p199, %p200
      %s202 = ssub.s32 %s34, %s41
      %p203 = scmp.eq.s32.totalorder %s202, 0
      %s205 = sadd.s32 %s204, 1
      %s206 = scalar_select %p203, %s204, %s205
      %p209 = pneg %p203
      %p210 = scmp.eq.s32.totalorder %s26, 7
      %p211 = por %p209, %p210
      %p212 = scmp.ne.s32.totalorder %s204, %s207
      %p213 = scmp.eq.s32.totalorder %s26, 0
      %p214 = por %p212, %p213
      %p215 = scmp.ne.s32.totalorder %s204, %s207
      %p216 = scmp.eq.s32.totalorder %s31, 7
      %p217 = por %p215, %p216
      %p218 = scmp.ne.s32.totalorder %s207, %s208
      %p219 = scmp.eq.s32.totalorder %s31, 0
      %p220 = por %p218, %p219
      %p221 = scmp.ne.s32.totalorder %s207, %s208
      %p222 = scmp.eq.s32.totalorder %s32, 7
      %p223 = por %p221, %p222
      %p225 = scmp.ne.s32.totalorder %s208, %s224
      %p226 = scmp.eq.s32.totalorder %s32, 0
      %p227 = por %p225, %p226
      %s228 = ssub.s32 %s34, %s41
      %p229 = scmp.eq.s32.totalorder %s228, 0
      %s231 = sadd.s32 %s230, 1
      %s232 = scalar_select %p229, %s230, %s231
      %p235 = pneg %p229
      %p236 = scmp.eq.s32.totalorder %s26, 7
      %p237 = por %p235, %p236
      %p238 = scmp.ne.s32.totalorder %s230, %s233
      %p239 = scmp.eq.s32.totalorder %s26, 0
      %p240 = por %p238, %p239
      %p241 = scmp.ne.s32.totalorder %s230, %s233
      %p242 = scmp.eq.s32.totalorder %s31, 7
      %p243 = por %p241, %p242
      %p244 = scmp.ne.s32.totalorder %s233, %s234
      %p245 = scmp.eq.s32.totalorder %s31, 0
      %p246 = por %p244, %p245
      %p247 = scmp.ne.s32.totalorder %s233, %s234
      %p248 = scmp.eq.s32.totalorder %s32, 7
      %p249 = por %p247, %p248
      %p251 = scmp.ne.s32.totalorder %s234, %s250
      %p252 = scmp.eq.s32.totalorder %s32, 0
      %p253 = por %p251, %p252
      %s254 = ssub.s32 %s34, %s41
      %p255 = scmp.eq.s32.totalorder %s254, 0
      %s257 = sadd.s32 %s256, 1
      %s258 = scalar_select %p255, %s256, %s257
      %p261 = pneg %p255
      %p262 = scmp.eq.s32.totalorder %s26, 7
      %p263 = por %p261, %p262
      %p264 = scmp.ne.s32.totalorder %s256, %s259
      %p265 = scmp.eq.s32.totalorder %s26, 0
      %p266 = por %p264, %p265
      %p267 = scmp.ne.s32.totalorder %s256, %s259
      %p268 = scmp.eq.s32.totalorder %s31, 7
      %p269 = por %p267, %p268
      %p270 = scmp.ne.s32.totalorder %s259, %s260
      %p271 = scmp.eq.s32.totalorder %s31, 0
      %p272 = por %p270, %p271
      %p273 = scmp.ne.s32.totalorder %s259, %s260
      %p274 = scmp.eq.s32.totalorder %s32, 7
      %p275 = por %p273, %p274
      %p277 = scmp.ne.s32.totalorder %s260, %s276
      %p278 = scmp.eq.s32.totalorder %s32, 0
      %p279 = por %p277, %p278
      %s280 = ssub.s32 %s34, %s41
      %p281 = scmp.eq.s32.totalorder %s280, 0
      %s283 = sadd.s32 %s282, 1
      %s284 = scalar_select %p281, %s282, %s283
      %p287 = pneg %p281
      %p288 = scmp.eq.s32.totalorder %s26, 7
      %p289 = por %p287, %p288
      %p290 = scmp.ne.s32.totalorder %s282, %s285
      %p291 = scmp.eq.s32.totalorder %s26, 0
      %p292 = por %p290, %p291
      %p293 = scmp.ne.s32.totalorder %s282, %s285
      %p294 = scmp.eq.s32.totalorder %s31, 7
      %p295 = por %p293, %p294
      %p296 = scmp.ne.s32.totalorder %s285, %s286
      %p297 = scmp.eq.s32.totalorder %s31, 0
      %p298 = por %p296, %p297
      %p299 = scmp.ne.s32.totalorder %s285, %s286
      %p300 = scmp.eq.s32.totalorder %s32, 7
      %p301 = por %p299, %p300
      %p303 = scmp.ne.s32.totalorder %s286, %s302
      %p304 = scmp.eq.s32.totalorder %s32, 0
      %p305 = por %p303, %p304
      %s307 = sadd.s32 %s306, 1
      %p310 = scmp.eq.s32.totalorder %s26, 7
      %p311 = scmp.ne.s32.totalorder %s306, %s308
      %p312 = scmp.eq.s32.totalorder %s26, 0
      %p313 = por %p311, %p312
      %p314 = scmp.ne.s32.totalorder %s306, %s308
      %p315 = scmp.eq.s32.totalorder %s31, 7
      %p316 = por %p314, %p315
      %p317 = scmp.ne.s32.totalorder %s308, %s309
      %p318 = scmp.eq.s32.totalorder %s31, 0
      %p319 = por %p317, %p318
      %p320 = scmp.ne.s32.totalorder %s308, %s309
      %p321 = scmp.eq.s32.totalorder %s32, 7
      %p322 = por %p320, %p321
      %p324 = scmp.ne.s32.totalorder %s309, %s323
      %p325 = scmp.eq.s32.totalorder %s32, 0
      %p326 = por %p324, %p325
      %s327 = ssub.s32 %s33, %s45
      %p328 = scmp.eq.s32.totalorder %s327, 0
      %s330 = sadd.s32 %s329, 1
      %s331 = scalar_select %p328, %s329, %s330
      %p334 = pneg %p328
      %p335 = scmp.eq.s32.totalorder %s26, 7
      %p336 = por %p334, %p335
      %p337 = scmp.ne.s32.totalorder %s329, %s332
      %p338 = scmp.eq.s32.totalorder %s26, 0
      %p339 = por %p337, %p338
      %p340 = scmp.ne.s32.totalorder %s329, %s332
      %p341 = scmp.eq.s32.totalorder %s31, 7
      %p342 = por %p340, %p341
      %p343 = scmp.ne.s32.totalorder %s332, %s333
      %p344 = scmp.eq.s32.totalorder %s31, 0
      %p345 = por %p343, %p344
      %p346 = scmp.ne.s32.totalorder %s332, %s333
      %p347 = scmp.eq.s32.totalorder %s32, 7
      %p348 = por %p346, %p347
      %p350 = scmp.ne.s32.totalorder %s333, %s349
      %p351 = scmp.eq.s32.totalorder %s32, 0
      %p352 = por %p350, %p351
      %p353 = scmp.le.s32.totalorder 1, %s26
      %p354 = scmp.lt.s32.totalorder %s26, 9
      %p355 = pnand %p353, %p354
      %p356 = pneg %p355
      // Predicated region
      $region9: #{tpu_custom_call.1} parent=5 // pred_check
        _
      $region10: #{tpu_custom_call.1} parent=5 // pred_check_branch
        %358 = sbr.rel (%p355) target = $region12
      $region11: #{tpu_custom_call.1} parent=5 // pred_region
        %s359 = ssub.s32 %s26, 1
        // Predicated region
        $region13: #{tpu_custom_call.1} parent=11 // pred_check
          %p360 = pneg %p319
        $region14: #{tpu_custom_call.1} parent=11 // pred_check_branch
          %362 = sbr.rel (%p360) target = $region16
        $region15: #{tpu_custom_call.1} parent=11 // pred_region
          _
        $region16: #{tpu_custom_call.1} parent=11 // pred_fallthru
          _
      $region12: #{tpu_custom_call.1} parent=5 // pred_fallthru
        _
      %p363 = scmp.lt.s32.totalorder %s26, 8
      // Predicated region
      $region17: #{tpu_custom_call.1} parent=5 // pred_check
        %p364 = pneg %p363
      $region18: #{tpu_custom_call.1} parent=5 // pred_check_branch
        %366 = sbr.rel (%p364) target = $region20
      $region19: #{tpu_custom_call.1} parent=5 // pred_region
        // Predicated region
        $region21: #{tpu_custom_call.1} parent=19 // pred_check
          %p367 = pneg %p58
        $region22: #{tpu_custom_call.1} parent=19 // pred_check_branch
          %369 = sbr.rel (%p367) target = $region24
        $region23: #{tpu_custom_call.1} parent=19 // pred_region
          %s370 = sand.u32 %s48, 1
          %s371 = scalar_lea.sflag [#allocation4], %s370
          %s372 = sand.u32 %s48, 1
          %s373 = smul.addr %s372, 128
          %s374 = scalar_lea.vmem [#allocation3], %s373
          %s375 = smul.u32 16, %s33
          %377 = vsyncadd %s371, 0
          %s378 = smul.addr %s375, 8
          %s379 = scalar_lea.hbm %s0, %s378
          %s380 = sshll.u32 %s379, 4
          %s381 = int_to_ptr.hbm [resolvable:$true] %s380
          %s382 = sshll.u32 %s374, 4
          %s383 = int_to_ptr.vmem [resolvable:$true] %s382
          %388 = dma.hbm_to_vmem [thread:$0]  %s381, 2048, %s383, %s371, 128, 128, 8
        $region24: #{tpu_custom_call.1} parent=19 // pred_fallthru
          _
        // Predicated region
        $region25: #{tpu_custom_call.1} parent=19 // pred_check
          %p389 = pneg %p84
        $region26: #{tpu_custom_call.1} parent=19 // pred_check_branch
          %391 = sbr.rel (%p389) target = $region28
        $region27: #{tpu_custom_call.1} parent=19 // pred_region
          %s392 = sand.u32 %s26, 1
          %s393 = scalar_lea.sflag [#allocation7], %s392
          %s394 = sand.u32 %s74, 1
          %s395 = smul.addr %s394, 128
          %s396 = scalar_lea.vmem [#allocation6], %s395
          %s397 = smul.u32 16, %s33
          %399 = vsyncadd %s393, 0
          %s400 = smul.addr %s397, 8
          %s401 = scalar_lea.hbm %s1, %s400
          %s402 = sshll.u32 %s401, 4
          %s403 = int_to_ptr.hbm [resolvable:$true] %s402
          %s404 = sshll.u32 %s396, 4
          %s405 = int_to_ptr.vmem [resolvable:$true] %s404
          %410 = dma.hbm_to_vmem [thread:$0]  %s403, 2048, %s405, %s393, 128, 128, 8
        $region28: #{tpu_custom_call.1} parent=19 // pred_fallthru
          _
        // Predicated region
        $region29: #{tpu_custom_call.1} parent=19 // pred_check
          %p411 = pneg %p110
        $region30: #{tpu_custom_call.1} parent=19 // pred_check_branch
          %413 = sbr.rel (%p411) target = $region32
        $region31: #{tpu_custom_call.1} parent=19 // pred_region
          %s414 = sand.u32 %s26, 1
          %s415 = scalar_lea.sflag [#allocation7], %s414
          %s416 = sand.u32 %s100, 1
          %s417 = smul.addr %s416, 128
          %s418 = scalar_lea.vmem [#allocation8], %s417
          %s419 = smul.u32 16, %s33
          %421 = vsyncadd %s415, 0
          %s422 = smul.addr %s419, 8
          %s423 = scalar_lea.hbm %s2, %s422
          %s424 = sshll.u32 %s423, 4
          %s425 = int_to_ptr.hbm [resolvable:$true] %s424
          %s426 = sshll.u32 %s418, 4
          %s427 = int_to_ptr.vmem [resolvable:$true] %s426
          %432 = dma.hbm_to_vmem [thread:$0]  %s425, 2048, %s427, %s415, 128, 128, 8
        $region32: #{tpu_custom_call.1} parent=19 // pred_fallthru
          _
        // Predicated region
        $region33: #{tpu_custom_call.1} parent=19 // pred_check
          %p433 = pneg %p136
        $region34: #{tpu_custom_call.1} parent=19 // pred_check_branch
          %435 = sbr.rel (%p433) target = $region36
        $region35: #{tpu_custom_call.1} parent=19 // pred_region
          %p436 = scmp.lt.s32.totalorder %s34, 3
          %s437 = scalar_select %p436, %s34, 3
          %s438 = smul.addr %s437, 4
          %s439 = smul.addr %s438, 4
          %s440 = scalar_lea.vmem %s3, %s439
        $region36: #{tpu_custom_call.1} parent=19 // pred_fallthru
          _
        // Predicated region
        $region37: #{tpu_custom_call.1} parent=19 // pred_check
          %p441 = pneg %p162
        $region38: #{tpu_custom_call.1} parent=19 // pred_check_branch
          %443 = sbr.rel (%p441) target = $region40
        $region39: #{tpu_custom_call.1} parent=19 // pred_region
          %p444 = scmp.lt.s32.totalorder %s34, 3
          %s445 = scalar_select %p444, %s34, 3
          %s446 = scalar_lea.vmem %s4, %s445
        $region40: #{tpu_custom_call.1} parent=19 // pred_fallthru
          _
        // Predicated region
        $region41: #{tpu_custom_call.1} parent=19 // pred_check
          %p447 = pneg %p188
        $region42: #{tpu_custom_call.1} parent=19 // pred_check_branch
          %449 = sbr.rel (%p447) target = $region44
        $region43: #{tpu_custom_call.1} parent=19 // pred_region
          %p450 = scmp.lt.s32.totalorder %s34, 3
          %s451 = scalar_select %p450, %s34, 3
          %s452 = smul.addr %s451, 4
          %s453 = smul.addr %s452, 4
          %s454 = scalar_lea.vmem %s5, %s453
        $region44: #{tpu_custom_call.1} parent=19 // pred_fallthru
          _
        // Predicated region
        $region45: #{tpu_custom_call.1} parent=19 // pred_check
          %p455 = pneg %p214
        $region46: #{tpu_custom_call.1} parent=19 // pred_check_branch
          %457 = sbr.rel (%p455) target = $region48
        $region47: #{tpu_custom_call.1} parent=19 // pred_region
          %p458 = scmp.lt.s32.totalorder %s34, 3
          %s459 = scalar_select %p458, %s34, 3
          %s460 = scalar_lea.vmem %s6, %s459
        $region48: #{tpu_custom_call.1} parent=19 // pred_fallthru
          _
        // Predicated region
        $region49: #{tpu_custom_call.1} parent=19 // pred_check
          %p461 = pneg %p240
        $region50: #{tpu_custom_call.1} parent=19 // pred_check_branch
          %463 = sbr.rel (%p461) target = $region52
        $region51: #{tpu_custom_call.1} parent=19 // pred_region
          %p464 = scmp.lt.s32.totalorder %s34, 3
          %s465 = scalar_select %p464, %s34, 3
          %s466 = smul.addr %s465, 4
          %s467 = smul.addr %s466, 4
          %s468 = scalar_lea.vmem %s7, %s467
        $region52: #{tpu_custom_call.1} parent=19 // pred_fallthru
          _
        // Predicated region
        $region53: #{tpu_custom_call.1} parent=19 // pred_check
          %p469 = pneg %p266
        $region54: #{tpu_custom_call.1} parent=19 // pred_check_branch
          %471 = sbr.rel (%p469) target = $region56
        $region55: #{tpu_custom_call.1} parent=19 // pred_region
          %p472 = scmp.lt.s32.totalorder %s34, 3
          %s473 = scalar_select %p472, %s34, 3
          %s474 = scalar_lea.vmem %s8, %s473
        $region56: #{tpu_custom_call.1} parent=19 // pred_fallthru
          _
        // Predicated region
        $region57: #{tpu_custom_call.1} parent=19 // pred_check
          %p475 = pneg %p292
        $region58: #{tpu_custom_call.1} parent=19 // pred_check_branch
          %477 = sbr.rel (%p475) target = $region60
        $region59: #{tpu_custom_call.1} parent=19 // pred_region
          %p478 = scmp.lt.s32.totalorder %s34, 3
          %s479 = scalar_select %p478, %s34, 3
          %s480 = smul.addr %s479, 4
          %s481 = smul.addr %s480, 4
          %s482 = scalar_lea.vmem %s9, %s481
        $region60: #{tpu_custom_call.1} parent=19 // pred_fallthru
          _
      $region20: #{tpu_custom_call.1} parent=5 // pred_fallthru
        _
      %p483 = scmp.le.s32.totalorder 1, %s26
      %p484 = scmp.lt.s32.totalorder %s26, 9
      %p485 = pnand %p483, %p484
      %p486 = pneg %p485
      // Predicated region
      $region61: #{tpu_custom_call.1} parent=5 // pred_check
        _
      $region62: #{tpu_custom_call.1} parent=5 // pred_check_branch
        %488 = sbr.rel (%p485) target = $region64
      $region63: #{tpu_custom_call.1} parent=5 // pred_region
        %s489 = ssub.s32 %s26, 1
        %s490 = sand.u32 %s51, 1
        %s491 = scalar_lea.sflag [#allocation4], %s490
        %s492 = sand.u32 %s51, 1
        %s493 = smul.addr %s492, 128
        %s494 = scalar_lea.vmem [#allocation3], %s493
        // Predicated region
        $region65: #{tpu_custom_call.1} parent=63 // pred_check
          %p495 = pneg %p64
        $region66: #{tpu_custom_call.1} parent=63 // pred_check_branch
          %497 = sbr.rel (%p495) target = $region68
        $region67: #{tpu_custom_call.1} parent=63 // pred_region
          %499 = dma.done %s491, 2048
        $region68: #{tpu_custom_call.1} parent=63 // pred_fallthru
          _
        %s500 = sand.u32 %s31, 1
        %s501 = scalar_lea.sflag [#allocation7], %s500
        %s502 = sand.u32 %s77, 1
        %s503 = smul.addr %s502, 128
        %s504 = scalar_lea.vmem [#allocation6], %s503
        // Predicated region
        $region69: #{tpu_custom_call.1} parent=63 // pred_check
          %p505 = pneg %p90
        $region70: #{tpu_custom_call.1} parent=63 // pred_check_branch
          %507 = sbr.rel (%p505) target = $region72
        $region71: #{tpu_custom_call.1} parent=63 // pred_region
          %509 = dma.done %s501, 2048
        $region72: #{tpu_custom_call.1} parent=63 // pred_fallthru
          _
        %s510 = sand.u32 %s31, 1
        %s511 = scalar_lea.sflag [#allocation7], %s510
        %s512 = sand.u32 %s103, 1
        %s513 = smul.addr %s512, 128
        %s514 = scalar_lea.vmem [#allocation8], %s513
        // Predicated region
        $region73: #{tpu_custom_call.1} parent=63 // pred_check
          %p515 = pneg %p116
        $region74: #{tpu_custom_call.1} parent=63 // pred_check_branch
          %517 = sbr.rel (%p515) target = $region76
        $region75: #{tpu_custom_call.1} parent=63 // pred_region
          %519 = dma.done %s511, 2048
        $region76: #{tpu_custom_call.1} parent=63 // pred_fallthru
          _
        %s520 = sand.u32 %s51, 1
        %s521 = scalar_lea.sflag [#allocation4], %s520
        %s522 = sand.u32 %s51, 1
        %s523 = smul.addr %s522, 128
        %s524 = scalar_lea.vmem [#allocation3], %s523
        %p525 = pneg %p64
        %p526 = pneg %p61
        %s527 = sand.u32 %s31, 1
        %s528 = scalar_lea.sflag [#allocation7], %s527
        %s529 = sand.u32 %s77, 1
        %s530 = smul.addr %s529, 128
        %s531 = scalar_lea.vmem [#allocation6], %s530
        %p532 = pneg %p90
        %p533 = pneg %p87
        %s534 = sand.u32 %s31, 1
        %s535 = scalar_lea.sflag [#allocation7], %s534
        %s536 = sand.u32 %s103, 1
        %s537 = smul.addr %s536, 128
        %s538 = scalar_lea.vmem [#allocation8], %s537
        %p539 = pneg %p116
        %p540 = pneg %p113
        %p541 = scmp.lt.s32.totalorder %s36, 3
        %s542 = scalar_select %p541, %s36, 3
        %s543 = smul.addr %s542, 4
        %s544 = smul.addr %s543, 4
        %s545 = scalar_lea.vmem %s3, %s544
        %p546 = pneg %p142
        %p547 = pneg %p139
        %p548 = scmp.lt.s32.totalorder %s36, 3
        %s549 = scalar_select %p548, %s36, 3
        %s550 = scalar_lea.vmem %s4, %s549
        %p551 = pneg %p168
        %p552 = pneg %p165
        %p553 = scmp.lt.s32.totalorder %s36, 3
        %s554 = scalar_select %p553, %s36, 3
        %s555 = smul.addr %s554, 4
        %s556 = smul.addr %s555, 4
        %s557 = scalar_lea.vmem %s5, %s556
        %p558 = pneg %p194
        %p559 = pneg %p191
        %p560 = scmp.lt.s32.totalorder %s36, 3
        %s561 = scalar_select %p560, %s36, 3
        %s562 = scalar_lea.vmem %s6, %s561
        %p563 = pneg %p220
        %p564 = pneg %p217
        %p565 = scmp.lt.s32.totalorder %s36, 3
        %s566 = scalar_select %p565, %s36, 3
        %s567 = smul.addr %s566, 4
        %s568 = smul.addr %s567, 4
        %s569 = scalar_lea.vmem %s7, %s568
        %p570 = pneg %p246
        %p571 = pneg %p243
        %p572 = scmp.lt.s32.totalorder %s36, 3
        %s573 = scalar_select %p572, %s36, 3
        %s574 = scalar_lea.vmem %s8, %s573
        %p575 = pneg %p272
        %p576 = pneg %p269
        %p577 = scmp.lt.s32.totalorder %s36, 3
        %s578 = scalar_select %p577, %s36, 3
        %s579 = smul.addr %s578, 4
        %s580 = smul.addr %s579, 4
        %s581 = scalar_lea.vmem %s9, %s580
        %p582 = pneg %p298
        %p583 = pneg %p295
        %p584 = pneg %p319
        %p585 = pneg %p316
        %p586 = pneg %p345
        %p587 = pneg %p342
        %s588 = sand.u32 %s332, 1
        %s589 = scalar_lea.sflag [#allocation5], %s588
        %s590 = sand.u32 %s332, 1
        %s591 = smul.addr %s590, 128
        %s592 = scalar_lea.vmem [#allocation9], %s591
        %s593 = smul.u32 16, %s35
        %s594 = smul.u32 16, %s35
        %s595 = smul.u32 16, %s35
        %p596 = scmp.lt.s32.totalorder %s36, 3
        %s597 = scalar_select %p596, %s36, 3
        %s598 = smul.addr %s597, 4
        %s599 = smul.addr %s598, 4
        %s600 = scalar_lea.vmem %s3, %s599
        %p601 = scmp.lt.s32.totalorder %s36, 3
        %s602 = scalar_select %p601, %s36, 3
        %s603 = scalar_lea.vmem %s4, %s602
        %p604 = scmp.lt.s32.totalorder %s36, 3
        %s605 = scalar_select %p604, %s36, 3
        %s606 = smul.addr %s605, 4
        %s607 = smul.addr %s606, 4
        %s608 = scalar_lea.vmem %s5, %s607
        %p609 = scmp.lt.s32.totalorder %s36, 3
        %s610 = scalar_select %p609, %s36, 3
        %s611 = scalar_lea.vmem %s6, %s610
        %p612 = scmp.lt.s32.totalorder %s36, 3
        %s613 = scalar_select %p612, %s36, 3
        %s614 = smul.addr %s613, 4
        %s615 = smul.addr %s614, 4
        %s616 = scalar_lea.vmem %s7, %s615
        %p617 = scmp.lt.s32.totalorder %s36, 3
        %s618 = scalar_select %p617, %s36, 3
        %s619 = scalar_lea.vmem %s8, %s618
        %p620 = scmp.lt.s32.totalorder %s36, 3
        %s621 = scalar_select %p620, %s36, 3
        %s622 = smul.addr %s621, 4
        %s623 = smul.addr %s622, 4
        %s624 = scalar_lea.vmem %s9, %s623
        %s625 = smul.u32 16, %s35
        %v627 = vld [vmem:[%s494] sm:$0xff]
        %v628 = vld [vmem:[%s494 + $0x8] sm:$0xff]
        %v629 = vld [vmem:[%s494 + $0x10] sm:$0xff]
        %v630 = vld [vmem:[%s494 + $0x18] sm:$0xff]
        %v631 = vld [vmem:[%s494 + $0x20] sm:$0xff]
        %v632 = vld [vmem:[%s494 + $0x28] sm:$0xff]
        %v633 = vld [vmem:[%s494 + $0x30] sm:$0xff]
        %v634 = vld [vmem:[%s494 + $0x38] sm:$0xff]
        %v635 = vld [vmem:[%s494 + $0x40] sm:$0xff]
        %v636 = vld [vmem:[%s494 + $0x48] sm:$0xff]
        %v637 = vld [vmem:[%s494 + $0x50] sm:$0xff]
        %v638 = vld [vmem:[%s494 + $0x58] sm:$0xff]
        %v639 = vld [vmem:[%s494 + $0x60] sm:$0xff]
        %v640 = vld [vmem:[%s494 + $0x68] sm:$0xff]
        %v641 = vld [vmem:[%s494 + $0x70] sm:$0xff]
        %v642 = vld [vmem:[%s494 + $0x78] sm:$0xff]
        %v643 = vpack.c.bf16 %v628, %v627
        %v644 = vpack.c.bf16 %v630, %v629
        %v645 = vpack.c.bf16 %v632, %v631
        %v646 = vpack.c.bf16 %v634, %v633
        %v647 = vpack.c.bf16 %v636, %v635
        %v648 = vpack.c.bf16 %v638, %v637
        %v649 = vpack.c.bf16 %v640, %v639
        %v650 = vpack.c.bf16 %v642, %v641
        %v651 = vld [vmem:[%s504] sm:$0xff]
        %v652 = vld [vmem:[%s504 + $0x8] sm:$0xff]
        %v653 = vld [vmem:[%s504 + $0x10] sm:$0xff]
        %v654 = vld [vmem:[%s504 + $0x18] sm:$0xff]
        %v655 = vld [vmem:[%s504 + $0x20] sm:$0xff]
        %v656 = vld [vmem:[%s504 + $0x28] sm:$0xff]
        %v657 = vld [vmem:[%s504 + $0x30] sm:$0xff]
        %v658 = vld [vmem:[%s504 + $0x38] sm:$0xff]
        %v659 = vld [vmem:[%s504 + $0x40] sm:$0xff]
        %v660 = vld [vmem:[%s504 + $0x48] sm:$0xff]
        %v661 = vld [vmem:[%s504 + $0x50] sm:$0xff]
        %v662 = vld [vmem:[%s504 + $0x58] sm:$0xff]
        %v663 = vld [vmem:[%s504 + $0x60] sm:$0xff]
        %v664 = vld [vmem:[%s504 + $0x68] sm:$0xff]
        %v665 = vld [vmem:[%s504 + $0x70] sm:$0xff]
        %v666 = vld [vmem:[%s504 + $0x78] sm:$0xff]
        %v667 = vpack.c.bf16 %v652, %v651
        %v668 = vpack.c.bf16 %v654, %v653
        %v669 = vpack.c.bf16 %v656, %v655
        %v670 = vpack.c.bf16 %v658, %v657
        %v671 = vpack.c.bf16 %v660, %v659
        %v672 = vpack.c.bf16 %v662, %v661
        %v673 = vpack.c.bf16 %v664, %v663
        %v674 = vpack.c.bf16 %v666, %v665
        %v675 = vld [vmem:[%s514] sm:$0xff]
        %v676 = vld [vmem:[%s514 + $0x8] sm:$0xff]
        %v677 = vld [vmem:[%s514 + $0x10] sm:$0xff]
        %v678 = vld [vmem:[%s514 + $0x18] sm:$0xff]
        %v679 = vld [vmem:[%s514 + $0x20] sm:$0xff]
        %v680 = vld [vmem:[%s514 + $0x28] sm:$0xff]
        %v681 = vld [vmem:[%s514 + $0x30] sm:$0xff]
        %v682 = vld [vmem:[%s514 + $0x38] sm:$0xff]
        %v683 = vld [vmem:[%s514 + $0x40] sm:$0xff]
        %v684 = vld [vmem:[%s514 + $0x48] sm:$0xff]
        %v685 = vld [vmem:[%s514 + $0x50] sm:$0xff]
        %v686 = vld [vmem:[%s514 + $0x58] sm:$0xff]
        %v687 = vld [vmem:[%s514 + $0x60] sm:$0xff]
        %v688 = vld [vmem:[%s514 + $0x68] sm:$0xff]
        %v689 = vld [vmem:[%s514 + $0x70] sm:$0xff]
        %v690 = vld [vmem:[%s514 + $0x78] sm:$0xff]
        %v691 = vpack.c.bf16 %v676, %v675
        %v692 = vpack.c.bf16 %v678, %v677
        %v693 = vpack.c.bf16 %v680, %v679
        %v694 = vpack.c.bf16 %v682, %v681
        %v695 = vpack.c.bf16 %v684, %v683
        %v696 = vpack.c.bf16 %v686, %v685
        %v697 = vpack.c.bf16 %v688, %v687
        %v698 = vpack.c.bf16 %v690, %v689
        %v699 = vld [vmem:[%s600] sm:$0xf]
        %v700 = vld [vmem:[%s600 + $0x4] sm:$0xf]
        %v701 = vld [vmem:[%s600 + $0x8] sm:$0xf]
        %v702 = vld [vmem:[%s600 + $0xc] sm:$0xf]
        %v703 = vld [vmem:[%s603] sm:$0x1]
        %v705 = vperm.slane %v703, 0
        %v711 = vunpack.c.l.b16 %v699
        %v712 = vunpack.c.l.b16 %v700
        %v713 = vunpack.c.l.b16 %v701
        %v714 = vunpack.c.l.b16 %v702
        %v715 = vpack.c.b16 %v712, %v711
        %v716 = vpack.c.b16 %v714, %v713
        %vm719 = vcmask 261120
        %v721 = vsel %vm719, %v643, 0
        %v724 = vsel %vm719, %v644, 0
        %v727 = vsel %vm719, %v645, 0
        %v730 = vsel %vm719, %v646, 0
        %v733 = vsel %vm719, %v647, 0
        %v736 = vsel %vm719, %v648, 0
        %v739 = vsel %vm719, %v649, 0
        %v742 = vsel %vm719, %v650, 0
        %744 = vmatpush.bf16.msra.mxu0 0
        %745 = vmatpush.bf16.msra.mxu0 0
        %746 = vmatpush.bf16.msra.mxu0 0
        %747 = vmatpush.bf16.msra.mxu0 0
        %748 = vmatpush.bf16.msra.mxu0 0
        %749 = vmatpush.bf16.msra.mxu0 0
        %750 = vmatpush.bf16.msra.mxu0 %v716
        %751 = vmatpush.bf16.msra.mxu0 %v715
        %752 = vmatmul.bf16.gmra.mxu0 %v721
        %v753 = vpop.f32.mrf.mxu0
        %v754 = vadd.f32 %v705, %v753
        %v755 = vpop.f32.mrf.mxu0
        %v756 = vadd.f32 %v705, %v755
        %757 = vmatmul.bf16.gmra.mxu0 %v724
        %v758 = vpop.f32.mrf.mxu0
        %v759 = vadd.f32 %v705, %v758
        %v760 = vpop.f32.mrf.mxu0
        %v761 = vadd.f32 %v705, %v760
        %762 = vmatmul.bf16.gmra.mxu0 %v727
        %v763 = vpop.f32.mrf.mxu0
        %v764 = vadd.f32 %v705, %v763
        %v765 = vpop.f32.mrf.mxu0
        %v766 = vadd.f32 %v705, %v765
        %767 = vmatmul.bf16.gmra.mxu0 %v730
        %v768 = vpop.f32.mrf.mxu0
        %v769 = vadd.f32 %v705, %v768
        %v770 = vpop.f32.mrf.mxu0
        %v771 = vadd.f32 %v705, %v770
        %772 = vmatmul.bf16.gmra.mxu0 %v733
        %v773 = vpop.f32.mrf.mxu0
        %v774 = vadd.f32 %v705, %v773
        %v775 = vpop.f32.mrf.mxu0
        %v776 = vadd.f32 %v705, %v775
        %777 = vmatmul.bf16.gmra.mxu0 %v736
        %v778 = vpop.f32.mrf.mxu0
        %v779 = vadd.f32 %v705, %v778
        %v780 = vpop.f32.mrf.mxu0
        %v781 = vadd.f32 %v705, %v780
        %782 = vmatmul.bf16.gmra.mxu0 %v739
        %v783 = vpop.f32.mrf.mxu0
        %v784 = vadd.f32 %v705, %v783
        %v785 = vpop.f32.mrf.mxu0
        %v786 = vadd.f32 %v705, %v785
        %787 = vmatmul.bf16.gmra.mxu0 %v742
        %v788 = vpop.f32.mrf.mxu0
        %v789 = vadd.f32 %v705, %v788
        %v790 = vpop.f32.mrf.mxu0
        %v791 = vadd.f32 %v705, %v790
        %792 = vdwg.mxu0
        %v793 = vld [vmem:[%s608] sm:$0xf]
        %v794 = vld [vmem:[%s608 + $0x4] sm:$0xf]
        %v795 = vld [vmem:[%s608 + $0x8] sm:$0xf]
        %v796 = vld [vmem:[%s608 + $0xc] sm:$0xf]
        %v797 = vld [vmem:[%s611] sm:$0x1]
        %v799 = vperm.slane %v797, 0
        %v805 = vunpack.c.l.b16 %v793
        %v806 = vunpack.c.l.b16 %v794
        %v807 = vunpack.c.l.b16 %v795
        %v808 = vunpack.c.l.b16 %v796
        %v809 = vpack.c.b16 %v806, %v805
        %v810 = vpack.c.b16 %v808, %v807
        %v814 = vsel %vm719, %v667, 0
        %v817 = vsel %vm719, %v668, 0
        %v820 = vsel %vm719, %v669, 0
        %v823 = vsel %vm719, %v670, 0
        %v826 = vsel %vm719, %v671, 0
        %v829 = vsel %vm719, %v672, 0
        %v832 = vsel %vm719, %v673, 0
        %v835 = vsel %vm719, %v674, 0
        %837 = vmatpush.bf16.msra.mxu0 0
        %838 = vmatpush.bf16.msra.mxu0 0
        %839 = vmatpush.bf16.msra.mxu0 0
        %840 = vmatpush.bf16.msra.mxu0 0
        %841 = vmatpush.bf16.msra.mxu0 0
        %842 = vmatpush.bf16.msra.mxu0 0
        %843 = vmatpush.bf16.msra.mxu0 %v810
        %844 = vmatpush.bf16.msra.mxu0 %v809
        %845 = vmatmul.bf16.gmra.mxu0 %v814
        %v846 = vpop.f32.mrf.mxu0
        %v847 = vadd.f32 %v799, %v846
        %v848 = vpop.f32.mrf.mxu0
        %v849 = vadd.f32 %v799, %v848
        %850 = vmatmul.bf16.gmra.mxu0 %v817
        %v851 = vpop.f32.mrf.mxu0
        %v852 = vadd.f32 %v799, %v851
        %v853 = vpop.f32.mrf.mxu0
        %v854 = vadd.f32 %v799, %v853
        %855 = vmatmul.bf16.gmra.mxu0 %v820
        %v856 = vpop.f32.mrf.mxu0
        %v857 = vadd.f32 %v799, %v856
        %v858 = vpop.f32.mrf.mxu0
        %v859 = vadd.f32 %v799, %v858
        %860 = vmatmul.bf16.gmra.mxu0 %v823
        %v861 = vpop.f32.mrf.mxu0
        %v862 = vadd.f32 %v799, %v861
        %v863 = vpop.f32.mrf.mxu0
        %v864 = vadd.f32 %v799, %v863
        %865 = vmatmul.bf16.gmra.mxu0 %v826
        %v866 = vpop.f32.mrf.mxu0
        %v867 = vadd.f32 %v799, %v866
        %v868 = vpop.f32.mrf.mxu0
        %v869 = vadd.f32 %v799, %v868
        %870 = vmatmul.bf16.gmra.mxu0 %v829
        %v871 = vpop.f32.mrf.mxu0
        %v872 = vadd.f32 %v799, %v871
        %v873 = vpop.f32.mrf.mxu0
        %v874 = vadd.f32 %v799, %v873
        %875 = vmatmul.bf16.gmra.mxu0 %v832
        %v876 = vpop.f32.mrf.mxu0
        %v877 = vadd.f32 %v799, %v876
        %v878 = vpop.f32.mrf.mxu0
        %v879 = vadd.f32 %v799, %v878
        %880 = vmatmul.bf16.gmra.mxu0 %v835
        %v881 = vpop.f32.mrf.mxu0
        %v882 = vadd.f32 %v799, %v881
        %v883 = vpop.f32.mrf.mxu0
        %v884 = vadd.f32 %v799, %v883
        %885 = vdwg.mxu0
        %v886 = vld [vmem:[%s616] sm:$0xf]
        %v887 = vld [vmem:[%s616 + $0x4] sm:$0xf]
        %v888 = vld [vmem:[%s616 + $0x8] sm:$0xf]
        %v889 = vld [vmem:[%s616 + $0xc] sm:$0xf]
        %v890 = vld [vmem:[%s619] sm:$0x1]
        %v892 = vperm.slane %v890, 0
        %v898 = vunpack.c.l.b16 %v886
        %v899 = vunpack.c.l.b16 %v887
        %v900 = vunpack.c.l.b16 %v888
        %v901 = vunpack.c.l.b16 %v889
        %v902 = vpack.c.b16 %v899, %v898
        %v903 = vpack.c.b16 %v901, %v900
        %v907 = vsel %vm719, %v691, 0
        %v910 = vsel %vm719, %v692, 0
        %v913 = vsel %vm719, %v693, 0
        %v916 = vsel %vm719, %v694, 0
        %v919 = vsel %vm719, %v695, 0
        %v922 = vsel %vm719, %v696, 0
        %v925 = vsel %vm719, %v697, 0
        %v928 = vsel %vm719, %v698, 0
        %930 = vmatpush.bf16.msra.mxu0 0
        %931 = vmatpush.bf16.msra.mxu0 0
        %932 = vmatpush.bf16.msra.mxu0 0
        %933 = vmatpush.bf16.msra.mxu0 0
        %934 = vmatpush.bf16.msra.mxu0 0
        %935 = vmatpush.bf16.msra.mxu0 0
        %936 = vmatpush.bf16.msra.mxu0 %v903
        %937 = vmatpush.bf16.msra.mxu0 %v902
        %938 = vmatmul.bf16.gmra.mxu0 %v907
        %v939 = vpop.f32.mrf.mxu0
        %v940 = vadd.f32 %v892, %v939
        %v941 = vpop.f32.mrf.mxu0
        %v942 = vadd.f32 %v892, %v941
        %943 = vmatmul.bf16.gmra.mxu0 %v910
        %v944 = vpop.f32.mrf.mxu0
        %v945 = vadd.f32 %v892, %v944
        %v946 = vpop.f32.mrf.mxu0
        %v947 = vadd.f32 %v892, %v946
        %948 = vmatmul.bf16.gmra.mxu0 %v913
        %v949 = vpop.f32.mrf.mxu0
        %v950 = vadd.f32 %v892, %v949
        %v951 = vpop.f32.mrf.mxu0
        %v952 = vadd.f32 %v892, %v951
        %953 = vmatmul.bf16.gmra.mxu0 %v916
        %v954 = vpop.f32.mrf.mxu0
        %v955 = vadd.f32 %v892, %v954
        %v956 = vpop.f32.mrf.mxu0
        %v957 = vadd.f32 %v892, %v956
        %958 = vmatmul.bf16.gmra.mxu0 %v919
        %v959 = vpop.f32.mrf.mxu0
        %v960 = vadd.f32 %v892, %v959
        %v961 = vpop.f32.mrf.mxu0
        %v962 = vadd.f32 %v892, %v961
        %963 = vmatmul.bf16.gmra.mxu0 %v922
        %v964 = vpop.f32.mrf.mxu0
        %v965 = vadd.f32 %v892, %v964
        %v966 = vpop.f32.mrf.mxu0
        %v967 = vadd.f32 %v892, %v966
        %968 = vmatmul.bf16.gmra.mxu0 %v925
        %v969 = vpop.f32.mrf.mxu0
        %v970 = vadd.f32 %v892, %v969
        %v971 = vpop.f32.mrf.mxu0
        %v972 = vadd.f32 %v892, %v971
        %973 = vmatmul.bf16.gmra.mxu0 %v928
        %v974 = vpop.f32.mrf.mxu0
        %v975 = vadd.f32 %v892, %v974
        %v976 = vpop.f32.mrf.mxu0
        %v977 = vadd.f32 %v892, %v976
        %978 = vdwg.mxu0
        %v979 = vpack.c.bf16 %v754, %v754
        %v980 = vpack.c.bf16 %v756, %v756
        %v981 = vpack.c.bf16 %v759, %v759
        %v982 = vpack.c.bf16 %v761, %v761
        %v983 = vpack.c.bf16 %v764, %v764
        %v984 = vpack.c.bf16 %v766, %v766
        %v985 = vpack.c.bf16 %v769, %v769
        %v986 = vpack.c.bf16 %v771, %v771
        %v987 = vpack.c.bf16 %v774, %v774
        %v988 = vpack.c.bf16 %v776, %v776
        %v989 = vpack.c.bf16 %v779, %v779
        %v990 = vpack.c.bf16 %v781, %v781
        %v991 = vpack.c.bf16 %v784, %v784
        %v992 = vpack.c.bf16 %v786, %v786
        %v993 = vpack.c.bf16 %v789, %v789
        %v994 = vpack.c.bf16 %v791, %v791
        %v995 = vpack.c.bf16 %v847, %v847
        %v996 = vpack.c.bf16 %v849, %v849
        %v997 = vpack.c.bf16 %v852, %v852
        %v998 = vpack.c.bf16 %v854, %v854
        %v999 = vpack.c.bf16 %v857, %v857
        %v1000 = vpack.c.bf16 %v859, %v859
        %v1001 = vpack.c.bf16 %v862, %v862
        %v1002 = vpack.c.bf16 %v864, %v864
        %v1003 = vpack.c.bf16 %v867, %v867
        %v1004 = vpack.c.bf16 %v869, %v869
        %v1005 = vpack.c.bf16 %v872, %v872
        %v1006 = vpack.c.bf16 %v874, %v874
        %v1007 = vpack.c.bf16 %v877, %v877
        %v1008 = vpack.c.bf16 %v879, %v879
        %v1009 = vpack.c.bf16 %v882, %v882
        %v1010 = vpack.c.bf16 %v884, %v884
        %v1011 = vpack.c.bf16 %v940, %v940
        %v1012 = vpack.c.bf16 %v942, %v942
        %v1013 = vpack.c.bf16 %v945, %v945
        %v1014 = vpack.c.bf16 %v947, %v947
        %v1015 = vpack.c.bf16 %v950, %v950
        %v1016 = vpack.c.bf16 %v952, %v952
        %v1017 = vpack.c.bf16 %v955, %v955
        %v1018 = vpack.c.bf16 %v957, %v957
        %v1019 = vpack.c.bf16 %v960, %v960
        %v1020 = vpack.c.bf16 %v962, %v962
        %v1021 = vpack.c.bf16 %v965, %v965
        %v1022 = vpack.c.bf16 %v967, %v967
        %v1023 = vpack.c.bf16 %v970, %v970
        %v1024 = vpack.c.bf16 %v972, %v972
        %v1025 = vpack.c.bf16 %v975, %v975
        %v1026 = vpack.c.bf16 %v977, %v977
        %vm1027 = vcmask 64512
        %v1029 = vsel %vm1027, %v979, 0
        %v1032 = vsel %vm1027, %v995, 0
        %1034 = vmatpush.bf16.xpose.msra.mxu0 0
        %1035 = vmatpush.bf16.xpose.msra.mxu0 0
        %1036 = vmatpush.bf16.xpose.msra.mxu0 0
        %1037 = vmatpush.bf16.xpose.msra.mxu0 0
        %1038 = vmatpush.bf16.xpose.msra.mxu0 0
        %1039 = vmatpush.bf16.xpose.msra.mxu0 0
        %1040 = vmatpush.bf16.xpose.msra.mxu0 0
        %1041 = vmatpush.bf16.xpose.msra.mxu0 %v1032
        %1042 = vmatmul.bf16.gmra.mxu0 %v1029
        %v1043 = vpop.f32.mrf.mxu0
        %v1044 = vadd.f32 0.0, %v1043
        %v1045 = vpop.f32.mrf.mxu0
        %1046 = vdwg.mxu0
        %v1048 = vsel %vm1027, %v980, 0
        %v1051 = vsel %vm1027, %v996, 0
        %1053 = vmatpush.bf16.xpose.msra.mxu0 0
        %1054 = vmatpush.bf16.xpose.msra.mxu0 0
        %1055 = vmatpush.bf16.xpose.msra.mxu0 0
        %1056 = vmatpush.bf16.xpose.msra.mxu0 0
        %1057 = vmatpush.bf16.xpose.msra.mxu0 0
        %1058 = vmatpush.bf16.xpose.msra.mxu0 0
        %1059 = vmatpush.bf16.xpose.msra.mxu0 0
        %1060 = vmatpush.bf16.xpose.msra.mxu0 %v1051
        %1061 = vmatmul.bf16.gmra.mxu0 %v1048
        %v1062 = vpop.f32.mrf.mxu0
        %v1063 = vadd.f32 0.0, %v1062
        %v1064 = vpop.f32.mrf.mxu0
        %1065 = vdwg.mxu0
        %v1067 = vsel %vm1027, %v981, 0
        %v1070 = vsel %vm1027, %v997, 0
        %1072 = vmatpush.bf16.xpose.msra.mxu0 0
        %1073 = vmatpush.bf16.xpose.msra.mxu0 0
        %1074 = vmatpush.bf16.xpose.msra.mxu0 0
        %1075 = vmatpush.bf16.xpose.msra.mxu0 0
        %1076 = vmatpush.bf16.xpose.msra.mxu0 0
        %1077 = vmatpush.bf16.xpose.msra.mxu0 0
        %1078 = vmatpush.bf16.xpose.msra.mxu0 0
        %1079 = vmatpush.bf16.xpose.msra.mxu0 %v1070
        %1080 = vmatmul.bf16.gmra.mxu0 %v1067
        %v1081 = vpop.f32.mrf.mxu0
        %v1082 = vadd.f32 0.0, %v1081
        %v1083 = vpop.f32.mrf.mxu0
        %1084 = vdwg.mxu0
        %v1086 = vsel %vm1027, %v982, 0
        %v1089 = vsel %vm1027, %v998, 0
        %1091 = vmatpush.bf16.xpose.msra.mxu0 0
        %1092 = vmatpush.bf16.xpose.msra.mxu0 0
        %1093 = vmatpush.bf16.xpose.msra.mxu0 0
        %1094 = vmatpush.bf16.xpose.msra.mxu0 0
        %1095 = vmatpush.bf16.xpose.msra.mxu0 0
        %1096 = vmatpush.bf16.xpose.msra.mxu0 0
        %1097 = vmatpush.bf16.xpose.msra.mxu0 0
        %1098 = vmatpush.bf16.xpose.msra.mxu0 %v1089
        %1099 = vmatmul.bf16.gmra.mxu0 %v1086
        %v1100 = vpop.f32.mrf.mxu0
        %v1101 = vadd.f32 0.0, %v1100
        %v1102 = vpop.f32.mrf.mxu0
        %1103 = vdwg.mxu0
        %v1105 = vsel %vm1027, %v983, 0
        %v1108 = vsel %vm1027, %v999, 0
        %1110 = vmatpush.bf16.xpose.msra.mxu0 0
        %1111 = vmatpush.bf16.xpose.msra.mxu0 0
        %1112 = vmatpush.bf16.xpose.msra.mxu0 0
        %1113 = vmatpush.bf16.xpose.msra.mxu0 0
        %1114 = vmatpush.bf16.xpose.msra.mxu0 0
        %1115 = vmatpush.bf16.xpose.msra.mxu0 0
        %1116 = vmatpush.bf16.xpose.msra.mxu0 0
        %1117 = vmatpush.bf16.xpose.msra.mxu0 %v1108
        %1118 = vmatmul.bf16.gmra.mxu0 %v1105
        %v1119 = vpop.f32.mrf.mxu0
        %v1120 = vadd.f32 0.0, %v1119
        %v1121 = vpop.f32.mrf.mxu0
        %1122 = vdwg.mxu0
        %v1124 = vsel %vm1027, %v984, 0
        %v1127 = vsel %vm1027, %v1000, 0
        %1129 = vmatpush.bf16.xpose.msra.mxu0 0
        %1130 = vmatpush.bf16.xpose.msra.mxu0 0
        %1131 = vmatpush.bf16.xpose.msra.mxu0 0
        %1132 = vmatpush.bf16.xpose.msra.mxu0 0
        %1133 = vmatpush.bf16.xpose.msra.mxu0 0
        %1134 = vmatpush.bf16.xpose.msra.mxu0 0
        %1135 = vmatpush.bf16.xpose.msra.mxu0 0
        %1136 = vmatpush.bf16.xpose.msra.mxu0 %v1127
        %1137 = vmatmul.bf16.gmra.mxu0 %v1124
        %v1138 = vpop.f32.mrf.mxu0
        %v1139 = vadd.f32 0.0, %v1138
        %v1140 = vpop.f32.mrf.mxu0
        %1141 = vdwg.mxu0
        %v1143 = vsel %vm1027, %v985, 0
        %v1146 = vsel %vm1027, %v1001, 0
        %1148 = vmatpush.bf16.xpose.msra.mxu0 0
        %1149 = vmatpush.bf16.xpose.msra.mxu0 0
        %1150 = vmatpush.bf16.xpose.msra.mxu0 0
        %1151 = vmatpush.bf16.xpose.msra.mxu0 0
        %1152 = vmatpush.bf16.xpose.msra.mxu0 0
        %1153 = vmatpush.bf16.xpose.msra.mxu0 0
        %1154 = vmatpush.bf16.xpose.msra.mxu0 0
        %1155 = vmatpush.bf16.xpose.msra.mxu0 %v1146
        %1156 = vmatmul.bf16.gmra.mxu0 %v1143
        %v1157 = vpop.f32.mrf.mxu0
        %v1158 = vadd.f32 0.0, %v1157
        %v1159 = vpop.f32.mrf.mxu0
        %1160 = vdwg.mxu0
        %v1162 = vsel %vm1027, %v986, 0
        %v1165 = vsel %vm1027, %v1002, 0
        %1167 = vmatpush.bf16.xpose.msra.mxu0 0
        %1168 = vmatpush.bf16.xpose.msra.mxu0 0
        %1169 = vmatpush.bf16.xpose.msra.mxu0 0
        %1170 = vmatpush.bf16.xpose.msra.mxu0 0
        %1171 = vmatpush.bf16.xpose.msra.mxu0 0
        %1172 = vmatpush.bf16.xpose.msra.mxu0 0
        %1173 = vmatpush.bf16.xpose.msra.mxu0 0
        %1174 = vmatpush.bf16.xpose.msra.mxu0 %v1165
        %1175 = vmatmul.bf16.gmra.mxu0 %v1162
        %v1176 = vpop.f32.mrf.mxu0
        %v1177 = vadd.f32 0.0, %v1176
        %v1178 = vpop.f32.mrf.mxu0
        %1179 = vdwg.mxu0
        %v1181 = vsel %vm1027, %v987, 0
        %v1184 = vsel %vm1027, %v1003, 0
        %1186 = vmatpush.bf16.xpose.msra.mxu0 0
        %1187 = vmatpush.bf16.xpose.msra.mxu0 0
        %1188 = vmatpush.bf16.xpose.msra.mxu0 0
        %1189 = vmatpush.bf16.xpose.msra.mxu0 0
        %1190 = vmatpush.bf16.xpose.msra.mxu0 0
        %1191 = vmatpush.bf16.xpose.msra.mxu0 0
        %1192 = vmatpush.bf16.xpose.msra.mxu0 0
        %1193 = vmatpush.bf16.xpose.msra.mxu0 %v1184
        %1194 = vmatmul.bf16.gmra.mxu0 %v1181
        %v1195 = vpop.f32.mrf.mxu0
        %v1196 = vadd.f32 0.0, %v1195
        %v1197 = vpop.f32.mrf.mxu0
        %1198 = vdwg.mxu0
        %v1200 = vsel %vm1027, %v988, 0
        %v1203 = vsel %vm1027, %v1004, 0
        %1205 = vmatpush.bf16.xpose.msra.mxu0 0
        %1206 = vmatpush.bf16.xpose.msra.mxu0 0
        %1207 = vmatpush.bf16.xpose.msra.mxu0 0
        %1208 = vmatpush.bf16.xpose.msra.mxu0 0
        %1209 = vmatpush.bf16.xpose.msra.mxu0 0
        %1210 = vmatpush.bf16.xpose.msra.mxu0 0
        %1211 = vmatpush.bf16.xpose.msra.mxu0 0
        %1212 = vmatpush.bf16.xpose.msra.mxu0 %v1203
        %1213 = vmatmul.bf16.gmra.mxu0 %v1200
        %v1214 = vpop.f32.mrf.mxu0
        %v1215 = vadd.f32 0.0, %v1214
        %v1216 = vpop.f32.mrf.mxu0
        %1217 = vdwg.mxu0
        %v1219 = vsel %vm1027, %v989, 0
        %v1222 = vsel %vm1027, %v1005, 0
        %1224 = vmatpush.bf16.xpose.msra.mxu0 0
        %1225 = vmatpush.bf16.xpose.msra.mxu0 0
        %1226 = vmatpush.bf16.xpose.msra.mxu0 0
        %1227 = vmatpush.bf16.xpose.msra.mxu0 0
        %1228 = vmatpush.bf16.xpose.msra.mxu0 0
        %1229 = vmatpush.bf16.xpose.msra.mxu0 0
        %1230 = vmatpush.bf16.xpose.msra.mxu0 0
        %1231 = vmatpush.bf16.xpose.msra.mxu0 %v1222
        %1232 = vmatmul.bf16.gmra.mxu0 %v1219
        %v1233 = vpop.f32.mrf.mxu0
        %v1234 = vadd.f32 0.0, %v1233
        %v1235 = vpop.f32.mrf.mxu0
        %1236 = vdwg.mxu0
        %v1238 = vsel %vm1027, %v990, 0
        %v1241 = vsel %vm1027, %v1006, 0
        %1243 = vmatpush.bf16.xpose.msra.mxu0 0
        %1244 = vmatpush.bf16.xpose.msra.mxu0 0
        %1245 = vmatpush.bf16.xpose.msra.mxu0 0
        %1246 = vmatpush.bf16.xpose.msra.mxu0 0
        %1247 = vmatpush.bf16.xpose.msra.mxu0 0
        %1248 = vmatpush.bf16.xpose.msra.mxu0 0
        %1249 = vmatpush.bf16.xpose.msra.mxu0 0
        %1250 = vmatpush.bf16.xpose.msra.mxu0 %v1241
        %1251 = vmatmul.bf16.gmra.mxu0 %v1238
        %v1252 = vpop.f32.mrf.mxu0
        %v1253 = vadd.f32 0.0, %v1252
        %v1254 = vpop.f32.mrf.mxu0
        %1255 = vdwg.mxu0
        %v1257 = vsel %vm1027, %v991, 0
        %v1260 = vsel %vm1027, %v1007, 0
        %1262 = vmatpush.bf16.xpose.msra.mxu0 0
        %1263 = vmatpush.bf16.xpose.msra.mxu0 0
        %1264 = vmatpush.bf16.xpose.msra.mxu0 0
        %1265 = vmatpush.bf16.xpose.msra.mxu0 0
        %1266 = vmatpush.bf16.xpose.msra.mxu0 0
        %1267 = vmatpush.bf16.xpose.msra.mxu0 0
        %1268 = vmatpush.bf16.xpose.msra.mxu0 0
        %1269 = vmatpush.bf16.xpose.msra.mxu0 %v1260
        %1270 = vmatmul.bf16.gmra.mxu0 %v1257
        %v1271 = vpop.f32.mrf.mxu0
        %v1272 = vadd.f32 0.0, %v1271
        %v1273 = vpop.f32.mrf.mxu0
        %1274 = vdwg.mxu0
        %v1276 = vsel %vm1027, %v992, 0
        %v1279 = vsel %vm1027, %v1008, 0
        %1281 = vmatpush.bf16.xpose.msra.mxu0 0
        %1282 = vmatpush.bf16.xpose.msra.mxu0 0
        %1283 = vmatpush.bf16.xpose.msra.mxu0 0
        %1284 = vmatpush.bf16.xpose.msra.mxu0 0
        %1285 = vmatpush.bf16.xpose.msra.mxu0 0
        %1286 = vmatpush.bf16.xpose.msra.mxu0 0
        %1287 = vmatpush.bf16.xpose.msra.mxu0 0
        %1288 = vmatpush.bf16.xpose.msra.mxu0 %v1279
        %1289 = vmatmul.bf16.gmra.mxu0 %v1276
        %v1290 = vpop.f32.mrf.mxu0
        %v1291 = vadd.f32 0.0, %v1290
        %v1292 = vpop.f32.mrf.mxu0
        %1293 = vdwg.mxu0
        %v1295 = vsel %vm1027, %v993, 0
        %v1298 = vsel %vm1027, %v1009, 0
        %1300 = vmatpush.bf16.xpose.msra.mxu0 0
        %1301 = vmatpush.bf16.xpose.msra.mxu0 0
        %1302 = vmatpush.bf16.xpose.msra.mxu0 0
        %1303 = vmatpush.bf16.xpose.msra.mxu0 0
        %1304 = vmatpush.bf16.xpose.msra.mxu0 0
        %1305 = vmatpush.bf16.xpose.msra.mxu0 0
        %1306 = vmatpush.bf16.xpose.msra.mxu0 0
        %1307 = vmatpush.bf16.xpose.msra.mxu0 %v1298
        %1308 = vmatmul.bf16.gmra.mxu0 %v1295
        %v1309 = vpop.f32.mrf.mxu0
        %v1310 = vadd.f32 0.0, %v1309
        %v1311 = vpop.f32.mrf.mxu0
        %1312 = vdwg.mxu0
        %v1314 = vsel %vm1027, %v994, 0
        %v1317 = vsel %vm1027, %v1010, 0
        %1319 = vmatpush.bf16.xpose.msra.mxu0 0
        %1320 = vmatpush.bf16.xpose.msra.mxu0 0
        %1321 = vmatpush.bf16.xpose.msra.mxu0 0
        %1322 = vmatpush.bf16.xpose.msra.mxu0 0
        %1323 = vmatpush.bf16.xpose.msra.mxu0 0
        %1324 = vmatpush.bf16.xpose.msra.mxu0 0
        %1325 = vmatpush.bf16.xpose.msra.mxu0 0
        %1326 = vmatpush.bf16.xpose.msra.mxu0 %v1317
        %1327 = vmatmul.bf16.gmra.mxu0 %v1314
        %v1328 = vpop.f32.mrf.mxu0
        %v1329 = vadd.f32 0.0, %v1328
        %v1330 = vpop.f32.mrf.mxu0
        %1331 = vdwg.mxu0
        %v1332 = vxor.u32 %v1044, 2147483648
        %v1333 = vxor.u32 %v1063, 2147483648
        %v1334 = vxor.u32 %v1082, 2147483648
        %v1335 = vxor.u32 %v1101, 2147483648
        %v1336 = vxor.u32 %v1120, 2147483648
        %v1337 = vxor.u32 %v1139, 2147483648
        %v1338 = vxor.u32 %v1158, 2147483648
        %v1339 = vxor.u32 %v1177, 2147483648
        %v1340 = vxor.u32 %v1196, 2147483648
        %v1341 = vxor.u32 %v1215, 2147483648
        %v1342 = vxor.u32 %v1234, 2147483648
        %v1343 = vxor.u32 %v1253, 2147483648
        %v1344 = vxor.u32 %v1272, 2147483648
        %v1345 = vxor.u32 %v1291, 2147483648
        %v1346 = vxor.u32 %v1310, 2147483648
        %v1347 = vxor.u32 %v1329, 2147483648
        %v1348 = vmul.f32 %v1332, 1.442695
        %v1349 = vpow.pop %v1348
        %v1350 = vmul.f32 %v1333, 1.442695
        %v1351 = vpow.pop %v1350
        %v1352 = vmul.f32 %v1334, 1.442695
        %v1353 = vpow.pop %v1352
        %v1354 = vmul.f32 %v1335, 1.442695
        %v1355 = vpow.pop %v1354
        %v1356 = vmul.f32 %v1336, 1.442695
        %v1357 = vpow.pop %v1356
        %v1358 = vmul.f32 %v1337, 1.442695
        %v1359 = vpow.pop %v1358
        %v1360 = vmul.f32 %v1338, 1.442695
        %v1361 = vpow.pop %v1360
        %v1362 = vmul.f32 %v1339, 1.442695
        %v1363 = vpow.pop %v1362
        %v1364 = vmul.f32 %v1340, 1.442695
        %v1365 = vpow.pop %v1364
        %v1366 = vmul.f32 %v1341, 1.442695
        %v1367 = vpow.pop %v1366
        %v1368 = vmul.f32 %v1342, 1.442695
        %v1369 = vpow.pop %v1368
        %v1370 = vmul.f32 %v1343, 1.442695
        %v1371 = vpow.pop %v1370
        %v1372 = vmul.f32 %v1344, 1.442695
        %v1373 = vpow.pop %v1372
        %v1374 = vmul.f32 %v1345, 1.442695
        %v1375 = vpow.pop %v1374
        %v1376 = vmul.f32 %v1346, 1.442695
        %v1377 = vpow.pop %v1376
        %v1378 = vmul.f32 %v1347, 1.442695
        %v1379 = vpow.pop %v1378
        %v1380 = vadd.f32 %v1349, 1.0
        %v1381 = vadd.f32 %v1351, 1.0
        %v1382 = vadd.f32 %v1353, 1.0
        %v1383 = vadd.f32 %v1355, 1.0
        %v1384 = vadd.f32 %v1357, 1.0
        %v1385 = vadd.f32 %v1359, 1.0
        %v1386 = vadd.f32 %v1361, 1.0
        %v1387 = vadd.f32 %v1363, 1.0
        %v1388 = vadd.f32 %v1365, 1.0
        %v1389 = vadd.f32 %v1367, 1.0
        %v1390 = vadd.f32 %v1369, 1.0
        %v1391 = vadd.f32 %v1371, 1.0
        %v1392 = vadd.f32 %v1373, 1.0
        %v1393 = vadd.f32 %v1375, 1.0
        %v1394 = vadd.f32 %v1377, 1.0
        %v1395 = vadd.f32 %v1379, 1.0
        %v1396 = vrcp.pop %v1380
        %v1397 = vmul.f32 %v1380, %v1396
        %v1398 = vsub.f32 1.0, %v1397
        %v1399 = vmul.f32 %v1396, %v1398
        %v1400 = vadd.f32 %v1396, %v1399
        %vm1401 = vweird.f32 %v1380
        %vm1402 = vweird.f32 %v1396
        %vm1403 = vmor %vm1401, %vm1402
        %v1404 = vsel %vm1403, %v1396, %v1400
        %v1405 = vand.u32 2147483647, %v1380
        %vm1406 = vcmp.eq.f32.partialorder %v1405, 8.507059e+37
        %v1407 = vand.u32 %v1380, 2147483648
        %v1408 = vor.u32 1.1754944e-38, %v1407
        %v1409 = vsel %vm1406, %v1408, %v1404
        %v1410 = vmul.f32 1.0, %v1409
        %v1411 = vrcp.pop %v1381
        %v1412 = vmul.f32 %v1381, %v1411
        %v1413 = vsub.f32 1.0, %v1412
        %v1414 = vmul.f32 %v1411, %v1413
        %v1415 = vadd.f32 %v1411, %v1414
        %vm1416 = vweird.f32 %v1381
        %vm1417 = vweird.f32 %v1411
        %vm1418 = vmor %vm1416, %vm1417
        %v1419 = vsel %vm1418, %v1411, %v1415
        %v1420 = vand.u32 2147483647, %v1381
        %vm1421 = vcmp.eq.f32.partialorder %v1420, 8.507059e+37
        %v1422 = vand.u32 %v1381, 2147483648
        %v1423 = vor.u32 1.1754944e-38, %v1422
        %v1424 = vsel %vm1421, %v1423, %v1419
        %v1425 = vmul.f32 1.0, %v1424
        %v1426 = vrcp.pop %v1382
        %v1427 = vmul.f32 %v1382, %v1426
        %v1428 = vsub.f32 1.0, %v1427
        %v1429 = vmul.f32 %v1426, %v1428
        %v1430 = vadd.f32 %v1426, %v1429
        %vm1431 = vweird.f32 %v1382
        %vm1432 = vweird.f32 %v1426
        %vm1433 = vmor %vm1431, %vm1432
        %v1434 = vsel %vm1433, %v1426, %v1430
        %v1435 = vand.u32 2147483647, %v1382
        %vm1436 = vcmp.eq.f32.partialorder %v1435, 8.507059e+37
        %v1437 = vand.u32 %v1382, 2147483648
        %v1438 = vor.u32 1.1754944e-38, %v1437
        %v1439 = vsel %vm1436, %v1438, %v1434
        %v1440 = vmul.f32 1.0, %v1439
        %v1441 = vrcp.pop %v1383
        %v1442 = vmul.f32 %v1383, %v1441
        %v1443 = vsub.f32 1.0, %v1442
        %v1444 = vmul.f32 %v1441, %v1443
        %v1445 = vadd.f32 %v1441, %v1444
        %vm1446 = vweird.f32 %v1383
        %vm1447 = vweird.f32 %v1441
        %vm1448 = vmor %vm1446, %vm1447
        %v1449 = vsel %vm1448, %v1441, %v1445
        %v1450 = vand.u32 2147483647, %v1383
        %vm1451 = vcmp.eq.f32.partialorder %v1450, 8.507059e+37
        %v1452 = vand.u32 %v1383, 2147483648
        %v1453 = vor.u32 1.1754944e-38, %v1452
        %v1454 = vsel %vm1451, %v1453, %v1449
        %v1455 = vmul.f32 1.0, %v1454
        %v1456 = vrcp.pop %v1384
        %v1457 = vmul.f32 %v1384, %v1456
        %v1458 = vsub.f32 1.0, %v1457
        %v1459 = vmul.f32 %v1456, %v1458
        %v1460 = vadd.f32 %v1456, %v1459
        %vm1461 = vweird.f32 %v1384
        %vm1462 = vweird.f32 %v1456
        %vm1463 = vmor %vm1461, %vm1462
        %v1464 = vsel %vm1463, %v1456, %v1460
        %v1465 = vand.u32 2147483647, %v1384
        %vm1466 = vcmp.eq.f32.partialorder %v1465, 8.507059e+37
        %v1467 = vand.u32 %v1384, 2147483648
        %v1468 = vor.u32 1.1754944e-38, %v1467
        %v1469 = vsel %vm1466, %v1468, %v1464
        %v1470 = vmul.f32 1.0, %v1469
        %v1471 = vrcp.pop %v1385
        %v1472 = vmul.f32 %v1385, %v1471
        %v1473 = vsub.f32 1.0, %v1472
        %v1474 = vmul.f32 %v1471, %v1473
        %v1475 = vadd.f32 %v1471, %v1474
        %vm1476 = vweird.f32 %v1385
        %vm1477 = vweird.f32 %v1471
        %vm1478 = vmor %vm1476, %vm1477
        %v1479 = vsel %vm1478, %v1471, %v1475
        %v1480 = vand.u32 2147483647, %v1385
        %vm1481 = vcmp.eq.f32.partialorder %v1480, 8.507059e+37
        %v1482 = vand.u32 %v1385, 2147483648
        %v1483 = vor.u32 1.1754944e-38, %v1482
        %v1484 = vsel %vm1481, %v1483, %v1479
        %v1485 = vmul.f32 1.0, %v1484
        %v1486 = vrcp.pop %v1386
        %v1487 = vmul.f32 %v1386, %v1486
        %v1488 = vsub.f32 1.0, %v1487
        %v1489 = vmul.f32 %v1486, %v1488
        %v1490 = vadd.f32 %v1486, %v1489
        %vm1491 = vweird.f32 %v1386
        %vm1492 = vweird.f32 %v1486
        %vm1493 = vmor %vm1491, %vm1492
        %v1494 = vsel %vm1493, %v1486, %v1490
        %v1495 = vand.u32 2147483647, %v1386
        %vm1496 = vcmp.eq.f32.partialorder %v1495, 8.507059e+37
        %v1497 = vand.u32 %v1386, 2147483648
        %v1498 = vor.u32 1.1754944e-38, %v1497
        %v1499 = vsel %vm1496, %v1498, %v1494
        %v1500 = vmul.f32 1.0, %v1499
        %v1501 = vrcp.pop %v1387
        %v1502 = vmul.f32 %v1387, %v1501
        %v1503 = vsub.f32 1.0, %v1502
        %v1504 = vmul.f32 %v1501, %v1503
        %v1505 = vadd.f32 %v1501, %v1504
        %vm1506 = vweird.f32 %v1387
        %vm1507 = vweird.f32 %v1501
        %vm1508 = vmor %vm1506, %vm1507
        %v1509 = vsel %vm1508, %v1501, %v1505
        %v1510 = vand.u32 2147483647, %v1387
        %vm1511 = vcmp.eq.f32.partialorder %v1510, 8.507059e+37
        %v1512 = vand.u32 %v1387, 2147483648
        %v1513 = vor.u32 1.1754944e-38, %v1512
        %v1514 = vsel %vm1511, %v1513, %v1509
        %v1515 = vmul.f32 1.0, %v1514
        %v1516 = vrcp.pop %v1388
        %v1517 = vmul.f32 %v1388, %v1516
        %v1518 = vsub.f32 1.0, %v1517
        %v1519 = vmul.f32 %v1516, %v1518
        %v1520 = vadd.f32 %v1516, %v1519
        %vm1521 = vweird.f32 %v1388
        %vm1522 = vweird.f32 %v1516
        %vm1523 = vmor %vm1521, %vm1522
        %v1524 = vsel %vm1523, %v1516, %v1520
        %v1525 = vand.u32 2147483647, %v1388
        %vm1526 = vcmp.eq.f32.partialorder %v1525, 8.507059e+37
        %v1527 = vand.u32 %v1388, 2147483648
        %v1528 = vor.u32 1.1754944e-38, %v1527
        %v1529 = vsel %vm1526, %v1528, %v1524
        %v1530 = vmul.f32 1.0, %v1529
        %v1531 = vrcp.pop %v1389
        %v1532 = vmul.f32 %v1389, %v1531
        %v1533 = vsub.f32 1.0, %v1532
        %v1534 = vmul.f32 %v1531, %v1533
        %v1535 = vadd.f32 %v1531, %v1534
        %vm1536 = vweird.f32 %v1389
        %vm1537 = vweird.f32 %v1531
        %vm1538 = vmor %vm1536, %vm1537
        %v1539 = vsel %vm1538, %v1531, %v1535
        %v1540 = vand.u32 2147483647, %v1389
        %vm1541 = vcmp.eq.f32.partialorder %v1540, 8.507059e+37
        %v1542 = vand.u32 %v1389, 2147483648
        %v1543 = vor.u32 1.1754944e-38, %v1542
        %v1544 = vsel %vm1541, %v1543, %v1539
        %v1545 = vmul.f32 1.0, %v1544
        %v1546 = vrcp.pop %v1390
        %v1547 = vmul.f32 %v1390, %v1546
        %v1548 = vsub.f32 1.0, %v1547
        %v1549 = vmul.f32 %v1546, %v1548
        %v1550 = vadd.f32 %v1546, %v1549
        %vm1551 = vweird.f32 %v1390
        %vm1552 = vweird.f32 %v1546
        %vm1553 = vmor %vm1551, %vm1552
        %v1554 = vsel %vm1553, %v1546, %v1550
        %v1555 = vand.u32 2147483647, %v1390
        %vm1556 = vcmp.eq.f32.partialorder %v1555, 8.507059e+37
        %v1557 = vand.u32 %v1390, 2147483648
        %v1558 = vor.u32 1.1754944e-38, %v1557
        %v1559 = vsel %vm1556, %v1558, %v1554
        %v1560 = vmul.f32 1.0, %v1559
        %v1561 = vrcp.pop %v1391
        %v1562 = vmul.f32 %v1391, %v1561
        %v1563 = vsub.f32 1.0, %v1562
        %v1564 = vmul.f32 %v1561, %v1563
        %v1565 = vadd.f32 %v1561, %v1564
        %vm1566 = vweird.f32 %v1391
        %vm1567 = vweird.f32 %v1561
        %vm1568 = vmor %vm1566, %vm1567
        %v1569 = vsel %vm1568, %v1561, %v1565
        %v1570 = vand.u32 2147483647, %v1391
        %vm1571 = vcmp.eq.f32.partialorder %v1570, 8.507059e+37
        %v1572 = vand.u32 %v1391, 2147483648
        %v1573 = vor.u32 1.1754944e-38, %v1572
        %v1574 = vsel %vm1571, %v1573, %v1569
        %v1575 = vmul.f32 1.0, %v1574
        %v1576 = vrcp.pop %v1392
        %v1577 = vmul.f32 %v1392, %v1576
        %v1578 = vsub.f32 1.0, %v1577
        %v1579 = vmul.f32 %v1576, %v1578
        %v1580 = vadd.f32 %v1576, %v1579
        %vm1581 = vweird.f32 %v1392
        %vm1582 = vweird.f32 %v1576
        %vm1583 = vmor %vm1581, %vm1582
        %v1584 = vsel %vm1583, %v1576, %v1580
        %v1585 = vand.u32 2147483647, %v1392
        %vm1586 = vcmp.eq.f32.partialorder %v1585, 8.507059e+37
        %v1587 = vand.u32 %v1392, 2147483648
        %v1588 = vor.u32 1.1754944e-38, %v1587
        %v1589 = vsel %vm1586, %v1588, %v1584
        %v1590 = vmul.f32 1.0, %v1589
        %v1591 = vrcp.pop %v1393
        %v1592 = vmul.f32 %v1393, %v1591
        %v1593 = vsub.f32 1.0, %v1592
        %v1594 = vmul.f32 %v1591, %v1593
        %v1595 = vadd.f32 %v1591, %v1594
        %vm1596 = vweird.f32 %v1393
        %vm1597 = vweird.f32 %v1591
        %vm1598 = vmor %vm1596, %vm1597
        %v1599 = vsel %vm1598, %v1591, %v1595
        %v1600 = vand.u32 2147483647, %v1393
        %vm1601 = vcmp.eq.f32.partialorder %v1600, 8.507059e+37
        %v1602 = vand.u32 %v1393, 2147483648
        %v1603 = vor.u32 1.1754944e-38, %v1602
        %v1604 = vsel %vm1601, %v1603, %v1599
        %v1605 = vmul.f32 1.0, %v1604
        %v1606 = vrcp.pop %v1394
        %v1607 = vmul.f32 %v1394, %v1606
        %v1608 = vsub.f32 1.0, %v1607
        %v1609 = vmul.f32 %v1606, %v1608
        %v1610 = vadd.f32 %v1606, %v1609
        %vm1611 = vweird.f32 %v1394
        %vm1612 = vweird.f32 %v1606
        %vm1613 = vmor %vm1611, %vm1612
        %v1614 = vsel %vm1613, %v1606, %v1610
        %v1615 = vand.u32 2147483647, %v1394
        %vm1616 = vcmp.eq.f32.partialorder %v1615, 8.507059e+37
        %v1617 = vand.u32 %v1394, 2147483648
        %v1618 = vor.u32 1.1754944e-38, %v1617
        %v1619 = vsel %vm1616, %v1618, %v1614
        %v1620 = vmul.f32 1.0, %v1619
        %v1621 = vrcp.pop %v1395
        %v1622 = vmul.f32 %v1395, %v1621
        %v1623 = vsub.f32 1.0, %v1622
        %v1624 = vmul.f32 %v1621, %v1623
        %v1625 = vadd.f32 %v1621, %v1624
        %vm1626 = vweird.f32 %v1395
        %vm1627 = vweird.f32 %v1621
        %vm1628 = vmor %vm1626, %vm1627
        %v1629 = vsel %vm1628, %v1621, %v1625
        %v1630 = vand.u32 2147483647, %v1395
        %vm1631 = vcmp.eq.f32.partialorder %v1630, 8.507059e+37
        %v1632 = vand.u32 %v1395, 2147483648
        %v1633 = vor.u32 1.1754944e-38, %v1632
        %v1634 = vsel %vm1631, %v1633, %v1629
        %v1635 = vmul.f32 1.0, %v1634
        %v1636 = vsub.f32 %v1410, 0.5
        %v1637 = vsub.f32 %v1425, 0.5
        %v1638 = vsub.f32 %v1440, 0.5
        %v1639 = vsub.f32 %v1455, 0.5
        %v1640 = vsub.f32 %v1470, 0.5
        %v1641 = vsub.f32 %v1485, 0.5
        %v1642 = vsub.f32 %v1500, 0.5
        %v1643 = vsub.f32 %v1515, 0.5
        %v1644 = vsub.f32 %v1530, 0.5
        %v1645 = vsub.f32 %v1545, 0.5
        %v1646 = vsub.f32 %v1560, 0.5
        %v1647 = vsub.f32 %v1575, 0.5
        %v1648 = vsub.f32 %v1590, 0.5
        %v1649 = vsub.f32 %v1605, 0.5
        %v1650 = vsub.f32 %v1620, 0.5
        %v1651 = vsub.f32 %v1635, 0.5
        %v1652 = vsel %vm1027, %v1636, -inf
        %1653 = vmax.xlane.f32.xlu0 %v1652
        %v1654 = vpop.xlane.xlu0 %1653
        %v1655 = vsel %vm1027, %v1637, -inf
        %1656 = vmax.xlane.f32.xlu0 %v1655
        %v1657 = vpop.xlane.xlu0 %1656
        %v1658 = vsel %vm1027, %v1638, -inf
        %1659 = vmax.xlane.f32.xlu0 %v1658
        %v1660 = vpop.xlane.xlu0 %1659
        %v1661 = vsel %vm1027, %v1639, -inf
        %1662 = vmax.xlane.f32.xlu0 %v1661
        %v1663 = vpop.xlane.xlu0 %1662
        %v1664 = vsel %vm1027, %v1640, -inf
        %1665 = vmax.xlane.f32.xlu0 %v1664
        %v1666 = vpop.xlane.xlu0 %1665
        %v1667 = vsel %vm1027, %v1641, -inf
        %1668 = vmax.xlane.f32.xlu0 %v1667
        %v1669 = vpop.xlane.xlu0 %1668
        %v1670 = vsel %vm1027, %v1642, -inf
        %1671 = vmax.xlane.f32.xlu0 %v1670
        %v1672 = vpop.xlane.xlu0 %1671
        %v1673 = vsel %vm1027, %v1643, -inf
        %1674 = vmax.xlane.f32.xlu0 %v1673
        %v1675 = vpop.xlane.xlu0 %1674
        %v1676 = vsel %vm1027, %v1644, -inf
        %1677 = vmax.xlane.f32.xlu0 %v1676
        %v1678 = vpop.xlane.xlu0 %1677
        %v1679 = vsel %vm1027, %v1645, -inf
        %1680 = vmax.xlane.f32.xlu0 %v1679
        %v1681 = vpop.xlane.xlu0 %1680
        %v1682 = vsel %vm1027, %v1646, -inf
        %1683 = vmax.xlane.f32.xlu0 %v1682
        %v1684 = vpop.xlane.xlu0 %1683
        %v1685 = vsel %vm1027, %v1647, -inf
        %1686 = vmax.xlane.f32.xlu0 %v1685
        %v1687 = vpop.xlane.xlu0 %1686
        %v1688 = vsel %vm1027, %v1648, -inf
        %1689 = vmax.xlane.f32.xlu0 %v1688
        %v1690 = vpop.xlane.xlu0 %1689
        %v1691 = vsel %vm1027, %v1649, -inf
        %1692 = vmax.xlane.f32.xlu0 %v1691
        %v1693 = vpop.xlane.xlu0 %1692
        %v1694 = vsel %vm1027, %v1650, -inf
        %1695 = vmax.xlane.f32.xlu0 %v1694
        %v1696 = vpop.xlane.xlu0 %1695
        %v1697 = vsel %vm1027, %v1651, -inf
        %1698 = vmax.xlane.f32.xlu0 %v1697
        %v1699 = vpop.xlane.xlu0 %1698
        %v1700 = vsub.f32 %v1636, %v1654
        %v1701 = vsub.f32 %v1637, %v1657
        %v1702 = vsub.f32 %v1638, %v1660
        %v1703 = vsub.f32 %v1639, %v1663
        %v1704 = vsub.f32 %v1640, %v1666
        %v1705 = vsub.f32 %v1641, %v1669
        %v1706 = vsub.f32 %v1642, %v1672
        %v1707 = vsub.f32 %v1643, %v1675
        %v1708 = vsub.f32 %v1644, %v1678
        %v1709 = vsub.f32 %v1645, %v1681
        %v1710 = vsub.f32 %v1646, %v1684
        %v1711 = vsub.f32 %v1647, %v1687
        %v1712 = vsub.f32 %v1648, %v1690
        %v1713 = vsub.f32 %v1649, %v1693
        %v1714 = vsub.f32 %v1650, %v1696
        %v1715 = vsub.f32 %v1651, %v1699
        %v1716 = vmul.f32 %v1700, 1.442695
        %v1717 = vpow.pop %v1716
        %v1718 = vmul.f32 %v1701, 1.442695
        %v1719 = vpow.pop %v1718
        %v1720 = vmul.f32 %v1702, 1.442695
        %v1721 = vpow.pop %v1720
        %v1722 = vmul.f32 %v1703, 1.442695
        %v1723 = vpow.pop %v1722
        %v1724 = vmul.f32 %v1704, 1.442695
        %v1725 = vpow.pop %v1724
        %v1726 = vmul.f32 %v1705, 1.442695
        %v1727 = vpow.pop %v1726
        %v1728 = vmul.f32 %v1706, 1.442695
        %v1729 = vpow.pop %v1728
        %v1730 = vmul.f32 %v1707, 1.442695
        %v1731 = vpow.pop %v1730
        %v1732 = vmul.f32 %v1708, 1.442695
        %v1733 = vpow.pop %v1732
        %v1734 = vmul.f32 %v1709, 1.442695
        %v1735 = vpow.pop %v1734
        %v1736 = vmul.f32 %v1710, 1.442695
        %v1737 = vpow.pop %v1736
        %v1738 = vmul.f32 %v1711, 1.442695
        %v1739 = vpow.pop %v1738
        %v1740 = vmul.f32 %v1712, 1.442695
        %v1741 = vpow.pop %v1740
        %v1742 = vmul.f32 %v1713, 1.442695
        %v1743 = vpow.pop %v1742
        %v1744 = vmul.f32 %v1714, 1.442695
        %v1745 = vpow.pop %v1744
        %v1746 = vmul.f32 %v1715, 1.442695
        %v1747 = vpow.pop %v1746
        %v1748 = vsel %vm1027, %v1717, 0.0
        %1749 = vadd.xlane.f32.xlu0 %v1748
        %v1750 = vpop.xlane.xlu0 %1749
        %v1751 = vsel %vm1027, %v1719, 0.0
        %1752 = vadd.xlane.f32.xlu0 %v1751
        %v1753 = vpop.xlane.xlu0 %1752
        %v1754 = vsel %vm1027, %v1721, 0.0
        %1755 = vadd.xlane.f32.xlu0 %v1754
        %v1756 = vpop.xlane.xlu0 %1755
        %v1757 = vsel %vm1027, %v1723, 0.0
        %1758 = vadd.xlane.f32.xlu0 %v1757
        %v1759 = vpop.xlane.xlu0 %1758
        %v1760 = vsel %vm1027, %v1725, 0.0
        %1761 = vadd.xlane.f32.xlu0 %v1760
        %v1762 = vpop.xlane.xlu0 %1761
        %v1763 = vsel %vm1027, %v1727, 0.0
        %1764 = vadd.xlane.f32.xlu0 %v1763
        %v1765 = vpop.xlane.xlu0 %1764
        %v1766 = vsel %vm1027, %v1729, 0.0
        %1767 = vadd.xlane.f32.xlu0 %v1766
        %v1768 = vpop.xlane.xlu0 %1767
        %v1769 = vsel %vm1027, %v1731, 0.0
        %1770 = vadd.xlane.f32.xlu0 %v1769
        %v1771 = vpop.xlane.xlu0 %1770
        %v1772 = vsel %vm1027, %v1733, 0.0
        %1773 = vadd.xlane.f32.xlu0 %v1772
        %v1774 = vpop.xlane.xlu0 %1773
        %v1775 = vsel %vm1027, %v1735, 0.0
        %1776 = vadd.xlane.f32.xlu0 %v1775
        %v1777 = vpop.xlane.xlu0 %1776
        %v1778 = vsel %vm1027, %v1737, 0.0
        %1779 = vadd.xlane.f32.xlu0 %v1778
        %v1780 = vpop.xlane.xlu0 %1779
        %v1781 = vsel %vm1027, %v1739, 0.0
        %1782 = vadd.xlane.f32.xlu0 %v1781
        %v1783 = vpop.xlane.xlu0 %1782
        %v1784 = vsel %vm1027, %v1741, 0.0
        %1785 = vadd.xlane.f32.xlu0 %v1784
        %v1786 = vpop.xlane.xlu0 %1785
        %v1787 = vsel %vm1027, %v1743, 0.0
        %1788 = vadd.xlane.f32.xlu0 %v1787
        %v1789 = vpop.xlane.xlu0 %1788
        %v1790 = vsel %vm1027, %v1745, 0.0
        %1791 = vadd.xlane.f32.xlu0 %v1790
        %v1792 = vpop.xlane.xlu0 %1791
        %v1793 = vsel %vm1027, %v1747, 0.0
        %1794 = vadd.xlane.f32.xlu0 %v1793
        %v1795 = vpop.xlane.xlu0 %1794
        %v1796 = vrcp.pop %v1750
        %v1797 = vrcp.pop %v1753
        %v1798 = vrcp.pop %v1756
        %v1799 = vrcp.pop %v1759
        %v1800 = vrcp.pop %v1762
        %v1801 = vrcp.pop %v1765
        %v1802 = vrcp.pop %v1768
        %v1803 = vrcp.pop %v1771
        %v1804 = vrcp.pop %v1774
        %v1805 = vrcp.pop %v1777
        %v1806 = vrcp.pop %v1780
        %v1807 = vrcp.pop %v1783
        %v1808 = vrcp.pop %v1786
        %v1809 = vrcp.pop %v1789
        %v1810 = vrcp.pop %v1792
        %v1811 = vrcp.pop %v1795
        %v1812 = vmul.f32 %v1717, %v1796
        %v1813 = vmul.f32 %v1719, %v1797
        %v1814 = vmul.f32 %v1721, %v1798
        %v1815 = vmul.f32 %v1723, %v1799
        %v1816 = vmul.f32 %v1725, %v1800
        %v1817 = vmul.f32 %v1727, %v1801
        %v1818 = vmul.f32 %v1729, %v1802
        %v1819 = vmul.f32 %v1731, %v1803
        %v1820 = vmul.f32 %v1733, %v1804
        %v1821 = vmul.f32 %v1735, %v1805
        %v1822 = vmul.f32 %v1737, %v1806
        %v1823 = vmul.f32 %v1739, %v1807
        %v1824 = vmul.f32 %v1741, %v1808
        %v1825 = vmul.f32 %v1743, %v1809
        %v1826 = vmul.f32 %v1745, %v1810
        %v1827 = vmul.f32 %v1747, %v1811
        %v1828 = vpack.c.bf16 %v1812, %v1812
        %v1829 = vpack.c.bf16 %v1813, %v1813
        %v1830 = vpack.c.bf16 %v1814, %v1814
        %v1831 = vpack.c.bf16 %v1815, %v1815
        %v1832 = vpack.c.bf16 %v1816, %v1816
        %v1833 = vpack.c.bf16 %v1817, %v1817
        %v1834 = vpack.c.bf16 %v1818, %v1818
        %v1835 = vpack.c.bf16 %v1819, %v1819
        %v1836 = vpack.c.bf16 %v1820, %v1820
        %v1837 = vpack.c.bf16 %v1821, %v1821
        %v1838 = vpack.c.bf16 %v1822, %v1822
        %v1839 = vpack.c.bf16 %v1823, %v1823
        %v1840 = vpack.c.bf16 %v1824, %v1824
        %v1841 = vpack.c.bf16 %v1825, %v1825
        %v1842 = vpack.c.bf16 %v1826, %v1826
        %v1843 = vpack.c.bf16 %v1827, %v1827
        %v1845 = vsel %vm1027, %v1828, 0
        %vm1847 = vcmask 1043456
        %v1849 = vsel %vm1847, %v1011, 0
        %1851 = vmatpush.bf16.msra.mxu0 0
        %1852 = vmatpush.bf16.msra.mxu0 0
        %1853 = vmatpush.bf16.msra.mxu0 0
        %1854 = vmatpush.bf16.msra.mxu0 0
        %1855 = vmatpush.bf16.msra.mxu0 0
        %1856 = vmatpush.bf16.msra.mxu0 0
        %1857 = vmatpush.bf16.msra.mxu0 0
        %1858 = vmatpush.bf16.msra.mxu0 %v1849
        %1859 = vmatmul.bf16.gmra.mxu0 %v1845
        %v1860 = vpop.f32.mrf.mxu0
        %v1861 = vadd.f32 0.0, %v1860
        %v1862 = vpop.f32.mrf.mxu0
        %1863 = vdwg.mxu0
        %v1865 = vsel %vm1027, %v1829, 0
        %v1868 = vsel %vm1847, %v1012, 0
        %1870 = vmatpush.bf16.msra.mxu0 0
        %1871 = vmatpush.bf16.msra.mxu0 0
        %1872 = vmatpush.bf16.msra.mxu0 0
        %1873 = vmatpush.bf16.msra.mxu0 0
        %1874 = vmatpush.bf16.msra.mxu0 0
        %1875 = vmatpush.bf16.msra.mxu0 0
        %1876 = vmatpush.bf16.msra.mxu0 0
        %1877 = vmatpush.bf16.msra.mxu0 %v1868
        %1878 = vmatmul.bf16.gmra.mxu0 %v1865
        %v1879 = vpop.f32.mrf.mxu0
        %v1880 = vadd.f32 0.0, %v1879
        %v1881 = vpop.f32.mrf.mxu0
        %1882 = vdwg.mxu0
        %v1884 = vsel %vm1027, %v1830, 0
        %v1887 = vsel %vm1847, %v1013, 0
        %1889 = vmatpush.bf16.msra.mxu0 0
        %1890 = vmatpush.bf16.msra.mxu0 0
        %1891 = vmatpush.bf16.msra.mxu0 0
        %1892 = vmatpush.bf16.msra.mxu0 0
        %1893 = vmatpush.bf16.msra.mxu0 0
        %1894 = vmatpush.bf16.msra.mxu0 0
        %1895 = vmatpush.bf16.msra.mxu0 0
        %1896 = vmatpush.bf16.msra.mxu0 %v1887
        %1897 = vmatmul.bf16.gmra.mxu0 %v1884
        %v1898 = vpop.f32.mrf.mxu0
        %v1899 = vadd.f32 0.0, %v1898
        %v1900 = vpop.f32.mrf.mxu0
        %1901 = vdwg.mxu0
        %v1903 = vsel %vm1027, %v1831, 0
        %v1906 = vsel %vm1847, %v1014, 0
        %1908 = vmatpush.bf16.msra.mxu0 0
        %1909 = vmatpush.bf16.msra.mxu0 0
        %1910 = vmatpush.bf16.msra.mxu0 0
        %1911 = vmatpush.bf16.msra.mxu0 0
        %1912 = vmatpush.bf16.msra.mxu0 0
        %1913 = vmatpush.bf16.msra.mxu0 0
        %1914 = vmatpush.bf16.msra.mxu0 0
        %1915 = vmatpush.bf16.msra.mxu0 %v1906
        %1916 = vmatmul.bf16.gmra.mxu0 %v1903
        %v1917 = vpop.f32.mrf.mxu0
        %v1918 = vadd.f32 0.0, %v1917
        %v1919 = vpop.f32.mrf.mxu0
        %1920 = vdwg.mxu0
        %v1922 = vsel %vm1027, %v1832, 0
        %v1925 = vsel %vm1847, %v1015, 0
        %1927 = vmatpush.bf16.msra.mxu0 0
        %1928 = vmatpush.bf16.msra.mxu0 0
        %1929 = vmatpush.bf16.msra.mxu0 0
        %1930 = vmatpush.bf16.msra.mxu0 0
        %1931 = vmatpush.bf16.msra.mxu0 0
        %1932 = vmatpush.bf16.msra.mxu0 0
        %1933 = vmatpush.bf16.msra.mxu0 0
        %1934 = vmatpush.bf16.msra.mxu0 %v1925
        %1935 = vmatmul.bf16.gmra.mxu0 %v1922
        %v1936 = vpop.f32.mrf.mxu0
        %v1937 = vadd.f32 0.0, %v1936
        %v1938 = vpop.f32.mrf.mxu0
        %1939 = vdwg.mxu0
        %v1941 = vsel %vm1027, %v1833, 0
        %v1944 = vsel %vm1847, %v1016, 0
        %1946 = vmatpush.bf16.msra.mxu0 0
        %1947 = vmatpush.bf16.msra.mxu0 0
        %1948 = vmatpush.bf16.msra.mxu0 0
        %1949 = vmatpush.bf16.msra.mxu0 0
        %1950 = vmatpush.bf16.msra.mxu0 0
        %1951 = vmatpush.bf16.msra.mxu0 0
        %1952 = vmatpush.bf16.msra.mxu0 0
        %1953 = vmatpush.bf16.msra.mxu0 %v1944
        %1954 = vmatmul.bf16.gmra.mxu0 %v1941
        %v1955 = vpop.f32.mrf.mxu0
        %v1956 = vadd.f32 0.0, %v1955
        %v1957 = vpop.f32.mrf.mxu0
        %1958 = vdwg.mxu0
        %v1960 = vsel %vm1027, %v1834, 0
        %v1963 = vsel %vm1847, %v1017, 0
        %1965 = vmatpush.bf16.msra.mxu0 0
        %1966 = vmatpush.bf16.msra.mxu0 0
        %1967 = vmatpush.bf16.msra.mxu0 0
        %1968 = vmatpush.bf16.msra.mxu0 0
        %1969 = vmatpush.bf16.msra.mxu0 0
        %1970 = vmatpush.bf16.msra.mxu0 0
        %1971 = vmatpush.bf16.msra.mxu0 0
        %1972 = vmatpush.bf16.msra.mxu0 %v1963
        %1973 = vmatmul.bf16.gmra.mxu0 %v1960
        %v1974 = vpop.f32.mrf.mxu0
        %v1975 = vadd.f32 0.0, %v1974
        %v1976 = vpop.f32.mrf.mxu0
        %1977 = vdwg.mxu0
        %v1979 = vsel %vm1027, %v1835, 0
        %v1982 = vsel %vm1847, %v1018, 0
        %1984 = vmatpush.bf16.msra.mxu0 0
        %1985 = vmatpush.bf16.msra.mxu0 0
        %1986 = vmatpush.bf16.msra.mxu0 0
        %1987 = vmatpush.bf16.msra.mxu0 0
        %1988 = vmatpush.bf16.msra.mxu0 0
        %1989 = vmatpush.bf16.msra.mxu0 0
        %1990 = vmatpush.bf16.msra.mxu0 0
        %1991 = vmatpush.bf16.msra.mxu0 %v1982
        %1992 = vmatmul.bf16.gmra.mxu0 %v1979
        %v1993 = vpop.f32.mrf.mxu0
        %v1994 = vadd.f32 0.0, %v1993
        %v1995 = vpop.f32.mrf.mxu0
        %1996 = vdwg.mxu0
        %v1998 = vsel %vm1027, %v1836, 0
        %v2001 = vsel %vm1847, %v1019, 0
        %2003 = vmatpush.bf16.msra.mxu0 0
        %2004 = vmatpush.bf16.msra.mxu0 0
        %2005 = vmatpush.bf16.msra.mxu0 0
        %2006 = vmatpush.bf16.msra.mxu0 0
        %2007 = vmatpush.bf16.msra.mxu0 0
        %2008 = vmatpush.bf16.msra.mxu0 0
        %2009 = vmatpush.bf16.msra.mxu0 0
        %2010 = vmatpush.bf16.msra.mxu0 %v2001
        %2011 = vmatmul.bf16.gmra.mxu0 %v1998
        %v2012 = vpop.f32.mrf.mxu0
        %v2013 = vadd.f32 0.0, %v2012
        %v2014 = vpop.f32.mrf.mxu0
        %2015 = vdwg.mxu0
        %v2017 = vsel %vm1027, %v1837, 0
        %v2020 = vsel %vm1847, %v1020, 0
        %2022 = vmatpush.bf16.msra.mxu0 0
        %2023 = vmatpush.bf16.msra.mxu0 0
        %2024 = vmatpush.bf16.msra.mxu0 0
        %2025 = vmatpush.bf16.msra.mxu0 0
        %2026 = vmatpush.bf16.msra.mxu0 0
        %2027 = vmatpush.bf16.msra.mxu0 0
        %2028 = vmatpush.bf16.msra.mxu0 0
        %2029 = vmatpush.bf16.msra.mxu0 %v2020
        %2030 = vmatmul.bf16.gmra.mxu0 %v2017
        %v2031 = vpop.f32.mrf.mxu0
        %v2032 = vadd.f32 0.0, %v2031
        %v2033 = vpop.f32.mrf.mxu0
        %2034 = vdwg.mxu0
        %v2036 = vsel %vm1027, %v1838, 0
        %v2039 = vsel %vm1847, %v1021, 0
        %2041 = vmatpush.bf16.msra.mxu0 0
        %2042 = vmatpush.bf16.msra.mxu0 0
        %2043 = vmatpush.bf16.msra.mxu0 0
        %2044 = vmatpush.bf16.msra.mxu0 0
        %2045 = vmatpush.bf16.msra.mxu0 0
        %2046 = vmatpush.bf16.msra.mxu0 0
        %2047 = vmatpush.bf16.msra.mxu0 0
        %2048 = vmatpush.bf16.msra.mxu0 %v2039
        %2049 = vmatmul.bf16.gmra.mxu0 %v2036
        %v2050 = vpop.f32.mrf.mxu0
        %v2051 = vadd.f32 0.0, %v2050
        %v2052 = vpop.f32.mrf.mxu0
        %2053 = vdwg.mxu0
        %v2055 = vsel %vm1027, %v1839, 0
        %v2058 = vsel %vm1847, %v1022, 0
        %2060 = vmatpush.bf16.msra.mxu0 0
        %2061 = vmatpush.bf16.msra.mxu0 0
        %2062 = vmatpush.bf16.msra.mxu0 0
        %2063 = vmatpush.bf16.msra.mxu0 0
        %2064 = vmatpush.bf16.msra.mxu0 0
        %2065 = vmatpush.bf16.msra.mxu0 0
        %2066 = vmatpush.bf16.msra.mxu0 0
        %2067 = vmatpush.bf16.msra.mxu0 %v2058
        %2068 = vmatmul.bf16.gmra.mxu0 %v2055
        %v2069 = vpop.f32.mrf.mxu0
        %v2070 = vadd.f32 0.0, %v2069
        %v2071 = vpop.f32.mrf.mxu0
        %2072 = vdwg.mxu0
        %v2074 = vsel %vm1027, %v1840, 0
        %v2077 = vsel %vm1847, %v1023, 0
        %2079 = vmatpush.bf16.msra.mxu0 0
        %2080 = vmatpush.bf16.msra.mxu0 0
        %2081 = vmatpush.bf16.msra.mxu0 0
        %2082 = vmatpush.bf16.msra.mxu0 0
        %2083 = vmatpush.bf16.msra.mxu0 0
        %2084 = vmatpush.bf16.msra.mxu0 0
        %2085 = vmatpush.bf16.msra.mxu0 0
        %2086 = vmatpush.bf16.msra.mxu0 %v2077
        %2087 = vmatmul.bf16.gmra.mxu0 %v2074
        %v2088 = vpop.f32.mrf.mxu0
        %v2089 = vadd.f32 0.0, %v2088
        %v2090 = vpop.f32.mrf.mxu0
        %2091 = vdwg.mxu0
        %v2093 = vsel %vm1027, %v1841, 0
        %v2096 = vsel %vm1847, %v1024, 0
        %2098 = vmatpush.bf16.msra.mxu0 0
        %2099 = vmatpush.bf16.msra.mxu0 0
        %2100 = vmatpush.bf16.msra.mxu0 0
        %2101 = vmatpush.bf16.msra.mxu0 0
        %2102 = vmatpush.bf16.msra.mxu0 0
        %2103 = vmatpush.bf16.msra.mxu0 0
        %2104 = vmatpush.bf16.msra.mxu0 0
        %2105 = vmatpush.bf16.msra.mxu0 %v2096
        %2106 = vmatmul.bf16.gmra.mxu0 %v2093
        %v2107 = vpop.f32.mrf.mxu0
        %v2108 = vadd.f32 0.0, %v2107
        %v2109 = vpop.f32.mrf.mxu0
        %2110 = vdwg.mxu0
        %v2112 = vsel %vm1027, %v1842, 0
        %v2115 = vsel %vm1847, %v1025, 0
        %2117 = vmatpush.bf16.msra.mxu0 0
        %2118 = vmatpush.bf16.msra.mxu0 0
        %2119 = vmatpush.bf16.msra.mxu0 0
        %2120 = vmatpush.bf16.msra.mxu0 0
        %2121 = vmatpush.bf16.msra.mxu0 0
        %2122 = vmatpush.bf16.msra.mxu0 0
        %2123 = vmatpush.bf16.msra.mxu0 0
        %2124 = vmatpush.bf16.msra.mxu0 %v2115
        %2125 = vmatmul.bf16.gmra.mxu0 %v2112
        %v2126 = vpop.f32.mrf.mxu0
        %v2127 = vadd.f32 0.0, %v2126
        %v2128 = vpop.f32.mrf.mxu0
        %2129 = vdwg.mxu0
        %v2131 = vsel %vm1027, %v1843, 0
        %v2134 = vsel %vm1847, %v1026, 0
        %2136 = vmatpush.bf16.msra.mxu0 0
        %2137 = vmatpush.bf16.msra.mxu0 0
        %2138 = vmatpush.bf16.msra.mxu0 0
        %2139 = vmatpush.bf16.msra.mxu0 0
        %2140 = vmatpush.bf16.msra.mxu0 0
        %2141 = vmatpush.bf16.msra.mxu0 0
        %2142 = vmatpush.bf16.msra.mxu0 0
        %2143 = vmatpush.bf16.msra.mxu0 %v2134
        %2144 = vmatmul.bf16.gmra.mxu0 %v2131
        %v2145 = vpop.f32.mrf.mxu0
        %v2146 = vadd.f32 0.0, %v2145
        %v2147 = vpop.f32.mrf.mxu0
        %2148 = vdwg.mxu0
        %v2149 = vpack.c.bf16 %v1880, %v1861
        %v2150 = vpack.c.bf16 %v1918, %v1899
        %v2151 = vpack.c.bf16 %v1956, %v1937
        %v2152 = vpack.c.bf16 %v1994, %v1975
        %v2153 = vpack.c.bf16 %v2032, %v2013
        %v2154 = vpack.c.bf16 %v2070, %v2051
        %v2155 = vpack.c.bf16 %v2108, %v2089
        %v2156 = vpack.c.bf16 %v2146, %v2127
        %v2157 = vld [vmem:[%s624] sm:$0xf]
        %v2158 = vld [vmem:[%s624 + $0x4] sm:$0xf]
        %v2159 = vld [vmem:[%s624 + $0x8] sm:$0xf]
        %v2160 = vld [vmem:[%s624 + $0xc] sm:$0xf]
        %v2165 = vunpack.c.l.b16 %v2157
        %v2166 = vunpack.c.l.b16 %v2158
        %v2167 = vunpack.c.l.b16 %v2159
        %v2168 = vunpack.c.l.b16 %v2160
        %v2169 = vpack.c.b16 %v2166, %v2165
        %v2170 = vpack.c.b16 %v2168, %v2167
        %v2174 = vsel %vm719, %v2149, 0
        %v2177 = vsel %vm719, %v2150, 0
        %v2180 = vsel %vm719, %v2151, 0
        %v2183 = vsel %vm719, %v2152, 0
        %v2186 = vsel %vm719, %v2153, 0
        %v2189 = vsel %vm719, %v2154, 0
        %v2192 = vsel %vm719, %v2155, 0
        %v2195 = vsel %vm719, %v2156, 0
        %2197 = vmatpush.bf16.msra.mxu0 0
        %2198 = vmatpush.bf16.msra.mxu0 0
        %2199 = vmatpush.bf16.msra.mxu0 0
        %2200 = vmatpush.bf16.msra.mxu0 0
        %2201 = vmatpush.bf16.msra.mxu0 0
        %2202 = vmatpush.bf16.msra.mxu0 0
        %2203 = vmatpush.bf16.msra.mxu0 %v2170
        %2204 = vmatpush.bf16.msra.mxu0 %v2169
        %2205 = vmatmul.bf16.gmra.mxu0 %v2174
        %v2206 = vpop.f32.mrf.mxu0
        %v2207 = vadd.f32 0.0, %v2206
        %v2208 = vpop.f32.mrf.mxu0
        %v2209 = vadd.f32 0.0, %v2208
        %2210 = vmatmul.bf16.gmra.mxu0 %v2177
        %v2211 = vpop.f32.mrf.mxu0
        %v2212 = vadd.f32 0.0, %v2211
        %v2213 = vpop.f32.mrf.mxu0
        %v2214 = vadd.f32 0.0, %v2213
        %2215 = vmatmul.bf16.gmra.mxu0 %v2180
        %v2216 = vpop.f32.mrf.mxu0
        %v2217 = vadd.f32 0.0, %v2216
        %v2218 = vpop.f32.mrf.mxu0
        %v2219 = vadd.f32 0.0, %v2218
        %2220 = vmatmul.bf16.gmra.mxu0 %v2183
        %v2221 = vpop.f32.mrf.mxu0
        %v2222 = vadd.f32 0.0, %v2221
        %v2223 = vpop.f32.mrf.mxu0
        %v2224 = vadd.f32 0.0, %v2223
        %2225 = vmatmul.bf16.gmra.mxu0 %v2186
        %v2226 = vpop.f32.mrf.mxu0
        %v2227 = vadd.f32 0.0, %v2226
        %v2228 = vpop.f32.mrf.mxu0
        %v2229 = vadd.f32 0.0, %v2228
        %2230 = vmatmul.bf16.gmra.mxu0 %v2189
        %v2231 = vpop.f32.mrf.mxu0
        %v2232 = vadd.f32 0.0, %v2231
        %v2233 = vpop.f32.mrf.mxu0
        %v2234 = vadd.f32 0.0, %v2233
        %2235 = vmatmul.bf16.gmra.mxu0 %v2192
        %v2236 = vpop.f32.mrf.mxu0
        %v2237 = vadd.f32 0.0, %v2236
        %v2238 = vpop.f32.mrf.mxu0
        %v2239 = vadd.f32 0.0, %v2238
        %2240 = vmatmul.bf16.gmra.mxu0 %v2195
        %v2241 = vpop.f32.mrf.mxu0
        %v2242 = vadd.f32 0.0, %v2241
        %v2243 = vpop.f32.mrf.mxu0
        %v2244 = vadd.f32 0.0, %v2243
        %2245 = vdwg.mxu0
        %p2246 = scmp.eq.s32.totalorder %s36, 0
        // Predicated region
        $region77: #{tpu_custom_call.1} parent=63 // pred_check
          %p2247 = pneg %p2246
        $region78: #{tpu_custom_call.1} parent=63 // pred_check_branch
          %2249 = sbr.rel (%p2247) target = $region80
        $region79: #{tpu_custom_call.1} parent=63 // pred_region
          %2250 = vst.msk [vmem:[#allocation2] sm:$0xff] %vm719, 0.0
          %2251 = vst.msk [vmem:[#allocation2 + $0x8] sm:$0xff] %vm719, 0.0
          %2252 = vst.msk [vmem:[#allocation2 + $0x10] sm:$0xff] %vm719, 0.0
          %2253 = vst.msk [vmem:[#allocation2 + $0x18] sm:$0xff] %vm719, 0.0
          %2254 = vst.msk [vmem:[#allocation2 + $0x20] sm:$0xff] %vm719, 0.0
          %2255 = vst.msk [vmem:[#allocation2 + $0x28] sm:$0xff] %vm719, 0.0
          %2256 = vst.msk [vmem:[#allocation2 + $0x30] sm:$0xff] %vm719, 0.0
          %2257 = vst.msk [vmem:[#allocation2 + $0x38] sm:$0xff] %vm719, 0.0
          %2258 = vst.msk [vmem:[#allocation2 + $0x40] sm:$0xff] %vm719, 0.0
          %2259 = vst.msk [vmem:[#allocation2 + $0x48] sm:$0xff] %vm719, 0.0
          %2260 = vst.msk [vmem:[#allocation2 + $0x50] sm:$0xff] %vm719, 0.0
          %2261 = vst.msk [vmem:[#allocation2 + $0x58] sm:$0xff] %vm719, 0.0
          %2262 = vst.msk [vmem:[#allocation2 + $0x60] sm:$0xff] %vm719, 0.0
          %2263 = vst.msk [vmem:[#allocation2 + $0x68] sm:$0xff] %vm719, 0.0
          %2264 = vst.msk [vmem:[#allocation2 + $0x70] sm:$0xff] %vm719, 0.0
          %2265 = vst.msk [vmem:[#allocation2 + $0x78] sm:$0xff] %vm719, 0.0
        $region80: #{tpu_custom_call.1} parent=63 // pred_fallthru
          _
        %v2266 = vld [vmem:[#allocation2] sm:$0xff]
        %v2267 = vld [vmem:[#allocation2 + $0x8] sm:$0xff]
        %v2268 = vld [vmem:[#allocation2 + $0x10] sm:$0xff]
        %v2269 = vld [vmem:[#allocation2 + $0x18] sm:$0xff]
        %v2270 = vld [vmem:[#allocation2 + $0x20] sm:$0xff]
        %v2271 = vld [vmem:[#allocation2 + $0x28] sm:$0xff]
        %v2272 = vld [vmem:[#allocation2 + $0x30] sm:$0xff]
        %v2273 = vld [vmem:[#allocation2 + $0x38] sm:$0xff]
        %v2274 = vld [vmem:[#allocation2 + $0x40] sm:$0xff]
        %v2275 = vld [vmem:[#allocation2 + $0x48] sm:$0xff]
        %v2276 = vld [vmem:[#allocation2 + $0x50] sm:$0xff]
        %v2277 = vld [vmem:[#allocation2 + $0x58] sm:$0xff]
        %v2278 = vld [vmem:[#allocation2 + $0x60] sm:$0xff]
        %v2279 = vld [vmem:[#allocation2 + $0x68] sm:$0xff]
        %v2280 = vld [vmem:[#allocation2 + $0x70] sm:$0xff]
        %v2281 = vld [vmem:[#allocation2 + $0x78] sm:$0xff]
        %v2282 = vadd.f32 %v2266, %v2207
        %v2283 = vadd.f32 %v2267, %v2209
        %v2284 = vadd.f32 %v2268, %v2212
        %v2285 = vadd.f32 %v2269, %v2214
        %v2286 = vadd.f32 %v2270, %v2217
        %v2287 = vadd.f32 %v2271, %v2219
        %v2288 = vadd.f32 %v2272, %v2222
        %v2289 = vadd.f32 %v2273, %v2224
        %v2290 = vadd.f32 %v2274, %v2227
        %v2291 = vadd.f32 %v2275, %v2229
        %v2292 = vadd.f32 %v2276, %v2232
        %v2293 = vadd.f32 %v2277, %v2234
        %v2294 = vadd.f32 %v2278, %v2237
        %v2295 = vadd.f32 %v2279, %v2239
        %v2296 = vadd.f32 %v2280, %v2242
        %v2297 = vadd.f32 %v2281, %v2244
        %2298 = vst.msk [vmem:[#allocation2] sm:$0xff] %vm719, %v2282
        %2299 = vst.msk [vmem:[#allocation2 + $0x8] sm:$0xff] %vm719, %v2283
        %2300 = vst.msk [vmem:[#allocation2 + $0x10] sm:$0xff] %vm719, %v2284
        %2301 = vst.msk [vmem:[#allocation2 + $0x18] sm:$0xff] %vm719, %v2285
        %2302 = vst.msk [vmem:[#allocation2 + $0x20] sm:$0xff] %vm719, %v2286
        %2303 = vst.msk [vmem:[#allocation2 + $0x28] sm:$0xff] %vm719, %v2287
        %2304 = vst.msk [vmem:[#allocation2 + $0x30] sm:$0xff] %vm719, %v2288
        %2305 = vst.msk [vmem:[#allocation2 + $0x38] sm:$0xff] %vm719, %v2289
        %2306 = vst.msk [vmem:[#allocation2 + $0x40] sm:$0xff] %vm719, %v2290
        %2307 = vst.msk [vmem:[#allocation2 + $0x48] sm:$0xff] %vm719, %v2291
        %2308 = vst.msk [vmem:[#allocation2 + $0x50] sm:$0xff] %vm719, %v2292
        %2309 = vst.msk [vmem:[#allocation2 + $0x58] sm:$0xff] %vm719, %v2293
        %2310 = vst.msk [vmem:[#allocation2 + $0x60] sm:$0xff] %vm719, %v2294
        %2311 = vst.msk [vmem:[#allocation2 + $0x68] sm:$0xff] %vm719, %v2295
        %2312 = vst.msk [vmem:[#allocation2 + $0x70] sm:$0xff] %vm719, %v2296
        %2313 = vst.msk [vmem:[#allocation2 + $0x78] sm:$0xff] %vm719, %v2297
        %p2314 = scmp.eq.s32.totalorder %s36, 3
        // Predicated region
        $region81: #{tpu_custom_call.1} parent=63 // pred_check
          %p2315 = pneg %p2314
        $region82: #{tpu_custom_call.1} parent=63 // pred_check_branch
          %2317 = sbr.rel (%p2315) target = $region84
        $region83: #{tpu_custom_call.1} parent=63 // pred_region
          %v2318 = vld [vmem:[#allocation2] sm:$0xff]
          %v2319 = vld [vmem:[#allocation2 + $0x8] sm:$0xff]
          %v2320 = vld [vmem:[#allocation2 + $0x10] sm:$0xff]
          %v2321 = vld [vmem:[#allocation2 + $0x18] sm:$0xff]
          %v2322 = vld [vmem:[#allocation2 + $0x20] sm:$0xff]
          %v2323 = vld [vmem:[#allocation2 + $0x28] sm:$0xff]
          %v2324 = vld [vmem:[#allocation2 + $0x30] sm:$0xff]
          %v2325 = vld [vmem:[#allocation2 + $0x38] sm:$0xff]
          %v2326 = vld [vmem:[#allocation2 + $0x40] sm:$0xff]
          %v2327 = vld [vmem:[#allocation2 + $0x48] sm:$0xff]
          %v2328 = vld [vmem:[#allocation2 + $0x50] sm:$0xff]
          %v2329 = vld [vmem:[#allocation2 + $0x58] sm:$0xff]
          %v2330 = vld [vmem:[#allocation2 + $0x60] sm:$0xff]
          %v2331 = vld [vmem:[#allocation2 + $0x68] sm:$0xff]
          %v2332 = vld [vmem:[#allocation2 + $0x70] sm:$0xff]
          %v2333 = vld [vmem:[#allocation2 + $0x78] sm:$0xff]
          %v2334 = vld [vmem:[%s10] sm:$0x1]
          %v2336 = vperm.slane %v2334, 0
          %v2338 = vadd.f32 %v2318, %v2336
          %v2339 = vadd.f32 %v2319, %v2336
          %v2340 = vadd.f32 %v2320, %v2336
          %v2341 = vadd.f32 %v2321, %v2336
          %v2342 = vadd.f32 %v2322, %v2336
          %v2343 = vadd.f32 %v2323, %v2336
          %v2344 = vadd.f32 %v2324, %v2336
          %v2345 = vadd.f32 %v2325, %v2336
          %v2346 = vadd.f32 %v2326, %v2336
          %v2347 = vadd.f32 %v2327, %v2336
          %v2348 = vadd.f32 %v2328, %v2336
          %v2349 = vadd.f32 %v2329, %v2336
          %v2350 = vadd.f32 %v2330, %v2336
          %v2351 = vadd.f32 %v2331, %v2336
          %v2352 = vadd.f32 %v2332, %v2336
          %v2353 = vadd.f32 %v2333, %v2336
          %2354 = vst.msk [vmem:[%s592] sm:$0xff] %vm719, %v2338
          %2355 = vst.msk [vmem:[%s592 + $0x8] sm:$0xff] %vm719, %v2339
          %2356 = vst.msk [vmem:[%s592 + $0x10] sm:$0xff] %vm719, %v2340
          %2357 = vst.msk [vmem:[%s592 + $0x18] sm:$0xff] %vm719, %v2341
          %2358 = vst.msk [vmem:[%s592 + $0x20] sm:$0xff] %vm719, %v2342
          %2359 = vst.msk [vmem:[%s592 + $0x28] sm:$0xff] %vm719, %v2343
          %2360 = vst.msk [vmem:[%s592 + $0x30] sm:$0xff] %vm719, %v2344
          %2361 = vst.msk [vmem:[%s592 + $0x38] sm:$0xff] %vm719, %v2345
          %2362 = vst.msk [vmem:[%s592 + $0x40] sm:$0xff] %vm719, %v2346
          %2363 = vst.msk [vmem:[%s592 + $0x48] sm:$0xff] %vm719, %v2347
          %2364 = vst.msk [vmem:[%s592 + $0x50] sm:$0xff] %vm719, %v2348
          %2365 = vst.msk [vmem:[%s592 + $0x58] sm:$0xff] %vm719, %v2349
          %2366 = vst.msk [vmem:[%s592 + $0x60] sm:$0xff] %vm719, %v2350
          %2367 = vst.msk [vmem:[%s592 + $0x68] sm:$0xff] %vm719, %v2351
          %2368 = vst.msk [vmem:[%s592 + $0x70] sm:$0xff] %vm719, %v2352
          %2369 = vst.msk [vmem:[%s592 + $0x78] sm:$0xff] %vm719, %v2353
        $region84: #{tpu_custom_call.1} parent=63 // pred_fallthru
          _
        %s2370 = sand.u32 %s332, 1
        %s2371 = scalar_lea.sflag [#allocation5], %s2370
        %s2372 = sand.u32 %s332, 1
        %s2373 = smul.addr %s2372, 128
        %s2374 = scalar_lea.vmem [#allocation9], %s2373
        // Predicated region
        $region85: #{tpu_custom_call.1} parent=63 // pred_check
          %p2375 = pneg %p342
        $region86: #{tpu_custom_call.1} parent=63 // pred_check_branch
          %2377 = sbr.rel (%p2375) target = $region88
        $region87: #{tpu_custom_call.1} parent=63 // pred_region
          %s2378 = smul.u32 16, %s35
          %2380 = vsyncadd %s2371, 0
          %s2381 = smul.addr %s2378, 8
          %s2382 = scalar_lea.hbm %s11, %s2381
          %s2383 = sshll.u32 %s2374, 4
          %s2384 = int_to_ptr.vmem [resolvable:$true] %s2383
          %s2385 = sshll.u32 %s2382, 4
          %s2386 = int_to_ptr.hbm [resolvable:$true] %s2385
          %2391 = dma.vmem_to_hbm [thread:$0]  %s2384, 2048, %s2386, %s2371, 128, 128, 8
        $region88: #{tpu_custom_call.1} parent=63 // pred_fallthru
          _
      $region64: #{tpu_custom_call.1} parent=5 // pred_fallthru
        _
      %p2392 = scmp.le.s32.totalorder 2, %s26
      // Predicated region
      $region89: #{tpu_custom_call.1} parent=5 // pred_check
        %p2393 = pneg %p2392
      $region90: #{tpu_custom_call.1} parent=5 // pred_check_branch
        %2395 = sbr.rel (%p2393) target = $region92
      $region91: #{tpu_custom_call.1} parent=5 // pred_region
        %s2396 = ssub.s32 %s26, 2
        // Predicated region
        $region93: #{tpu_custom_call.1} parent=91 // pred_check
          %p2397 = pneg %p348
        $region94: #{tpu_custom_call.1} parent=91 // pred_check_branch
          %2399 = sbr.rel (%p2397) target = $region96
        $region95: #{tpu_custom_call.1} parent=91 // pred_region
          %s2400 = sand.u32 %s333, 1
          %s2401 = scalar_lea.sflag [#allocation5], %s2400
          %s2402 = sand.u32 %s333, 1
          %s2403 = smul.addr %s2402, 128
          %s2404 = scalar_lea.vmem [#allocation9], %s2403
          %2406 = dma.done %s2401, 2048
        $region96: #{tpu_custom_call.1} parent=91 // pred_fallthru
          _
      $region92: #{tpu_custom_call.1} parent=5 // pred_fallthru
        _
    $region6: #{tpu_custom_call.1} parent=1 // loop_footer
      %s30 = sadd.s32 1, %s26
    $region7: #{tpu_custom_call.1} parent=1 // loop_footer_branch
      %25 = sbr.rel target = $region3
    $region8: #{tpu_custom_call.1} parent=1 // loop_exit
      _
    %2407 = vsyncpa [#allocation4], 1
    %s2408 = scalar_lea.sflag [#allocation4], 1
    %2409 = vsyncpa %s2408, 1
    %2410 = vsyncpa [#allocation7], 1
    %s2411 = scalar_lea.sflag [#allocation7], 1
    %2412 = vsyncpa %s2411, 1
    %2413 = vsyncpa [#allocation5], 1
    %s2414 = scalar_lea.sflag [#allocation5], 1
    %2415 = vsyncpa %s2414, 1

</llo_original>
